<compile_context>
chip_gen: v7x
topology: tpu7x:2x2x1
jax: 0.10.0
libtpu: 0.0.40
codegen_flags: <defaults>
</compile_context>

<pallas_src>
import functools

import jax
import jax.numpy as jnp
from jax.experimental import pallas as pl
from jax.experimental.pallas import tpu as pltpu


# ---------------------------------------------------------------------------
# Pallas kernel: fused 3-layer pointwise MLP + max-pool over K
# ---------------------------------------------------------------------------
def _msg_fused_kernel(x_ref, w1_ref, w2_ref, b2_ref, w3_ref, b3_ref, o_ref, *,
                      K, tm):
    # x_ref : [cin_pad, K*tm]  channels-first; lane order = (k major, group minor).
    #         Last real input channel is a constant 1.0 so layer-1 bias is
    #         carried inside W1 (no separate add).
    # w1_ref: [c1, cin_pad]    (b1 folded into the bias column)
    # w2_ref: [c2, c1]         b2_ref: [c2, 1]
    # w3_ref: [c3, c2]         b3_ref: [c3, 1]
    # o_ref : [c3, tm]         lane-dense output block (max over K applied)
    x = x_ref[...]
    h = jnp.dot(w1_ref[...], x, preferred_element_type=jnp.float32)
    h = jnp.maximum(h, 0.0)
    h = jnp.dot(w2_ref[...], h, preferred_element_type=jnp.float32) + b2_ref[...]
    h = jnp.maximum(h, 0.0)
    h = jnp.dot(w3_ref[...], h, preferred_element_type=jnp.float32) + b3_ref[...]
    h = jnp.maximum(h, 0.0)                          # [c3, K*tm]

    # Max-pool over the K samples: tm is a multiple of 128, so every slice is
    # lane-aligned (no relayout).  Single running accumulator keeps live set small.
    acc = h[:, :tm]
    for k in range(1, K):
        acc = jnp.maximum(acc, h[:, k * tm:(k + 1) * tm])
    o_ref[...] = acc


def msg_group_pallas(x_stack, w1s, w2s, b2s, w3s, b3s, *, tm, K):
    """x_stack: [nb, n_blocks, cin_pad, K*tm]  (nb = branches sharing nsample).

    Returns [nb, c3, n_blocks*tm] float32.
    """
    nb, n_blocks, cin_pad, ktm = x_stack.shape
    assert ktm == K * tm
    c1 = w1s.shape[1]
    c2 = w2s.shape[1]
    c3 = w3s.shape[1]
    m_pad = n_blocks * tm

    flops = 2 * nb * m_pad * K * (cin_pad * c1 + c1 * c2 + c2 * c3)
    bytes_accessed = 4 * (x_stack.size + w1s.size + w2s.size + b2s.size
                          + w3s.size + b3s.size + nb * c3 * m_pad)
    cost = pl.CostEstimate(flops=flops, transcendentals=0,
                           bytes_accessed=bytes_accessed)

    kernel = functools.partial(_msg_fused_kernel, K=K, tm=tm)

    return pl.pallas_call(
        kernel,
        out_shape=jax.ShapeDtypeStruct((nb, c3, m_pad), jnp.float32),
        grid_spec=pltpu.PrefetchScalarGridSpec(
            num_scalar_prefetch=0,
            grid=(nb, n_blocks),
            in_specs=[
                # branch / block dims squeezed; lanes carry (k, group)
                pl.BlockSpec((None, None, cin_pad, K * tm),
                             lambda b, i: (b, i, 0, 0)),
                pl.BlockSpec((None, c1, cin_pad), lambda b, i: (b, 0, 0)),
                pl.BlockSpec((None, c2, c1), lambda b, i: (b, 0, 0)),
                pl.BlockSpec((None, c2, 1), lambda b, i: (b, 0, 0)),
                pl.BlockSpec((None, c3, c2), lambda b, i: (b, 0, 0)),
                pl.BlockSpec((None, c3, 1), lambda b, i: (b, 0, 0)),
            ],
            out_specs=pl.BlockSpec((None, c3, tm), lambda b, i: (b, 0, i)),
        ),
        compiler_params=pltpu.CompilerParams(
            dimension_semantics=("parallel", "parallel")),
        cost_estimate=cost,
    )(x_stack, w1s, w2s, b2s, w3s, b3s)


# ---------------------------------------------------------------------------
# Small helpers
# ---------------------------------------------------------------------------
def _round_up(x, m):
    return ((x + m - 1) // m) * m


def _pad2(a, shape):
    return jnp.pad(a, [(0, t - s) for s, t in zip(a.shape, shape)])


def _pick_tm(m_pad, K, cin_pad, cdims, nb, vmem_budget_bytes=20 * 1024 * 1024):
    """Largest lane-dense tile (multiple of 128) dividing m_pad that fits an
    explicit VMEM budget (double-buffered input + compiler intermediates +
    double-buffered output).  Budget << 32 MiB scoped default on every
    generation, including v7x (64 MiB physical).  If only one branch is fused
    (nb == 1), prefer >= 2 grid steps so the v7x second TensorCore gets work."""
    c1, c2, c3 = cdims

    def fits(t):
        x_bytes = 2 * cin_pad * K * t * 4            # double-buffered input block
        h_bytes = (c1 + c2 + 2 * c3) * K * t * 4     # rough intermediate footprint
        o_bytes = 2 * c3 * t * 4                     # double-buffered output block
        return x_bytes + h_bytes + o_bytes <= vmem_budget_bytes

    cands = [t for t in (4096, 2048, 1024, 512, 256, 128)
             if m_pad % t == 0 and fits(t)]
    if not cands:
        return 128
    if nb >= 2:
        return cands[0]
    multi = [t for t in cands if m_pad // t >= 2]
    return multi[0] if multi else cands[0]


# ---------------------------------------------------------------------------
# Plain-JAX glue: FPS / ball query (sequential, data-dependent gathers)
# ---------------------------------------------------------------------------
def index_points(points, idx):
    """points [B, N, C], idx [B, ...] int  ->  [B, ..., C]."""
    B = points.shape[0]
    batch = jnp.arange(B).reshape((B,) + (1,) * (idx.ndim - 1))
    return points[batch, idx]


def farthest_point_sample(xyz, npoint):
    """xyz [B, N, 3] -> indices [B, npoint] (deterministic, seeded at index 0)."""
    B, N, _ = xyz.shape

    def body(i, state):
        centroids, distance, farthest = state
        centroids = centroids.at[:, i].set(farthest)
        centroid = index_points(xyz, farthest[:, None])        # [B, 1, 3]
        dist = jnp.sum((xyz - centroid) ** 2, axis=-1)          # [B, N]
        distance = jnp.minimum(distance, dist)
        farthest = jnp.argmax(distance, axis=-1).astype(jnp.int32)
        return centroids, distance, farthest

    centroids = jnp.zeros((B, npoint), dtype=jnp.int32)
    distance = jnp.full((B, N), 1e10, dtype=jnp.float32)
    farthest = jnp.zeros((B,), dtype=jnp.int32)
    centroids, _, _ = jax.lax.fori_loop(0, npoint, body,
                                        (centroids, distance, farthest))
    return centroids


def ball_query_indices(sqrdists, radius, nsample):
    """sqrdists [B, S, N] -> group indices [B, S, nsample]."""
    B, S, N = sqrdists.shape
    group_idx = jnp.broadcast_to(jnp.arange(N, dtype=jnp.int32), (B, S, N))
    group_idx = jnp.where(sqrdists > radius * radius, N, group_idx)
    group_idx = jnp.sort(group_idx, axis=-1)[:, :, :nsample]
    group_first = jnp.broadcast_to(group_idx[:, :, :1], group_idx.shape)
    group_idx = jnp.where(group_idx == N, group_first, group_idx)
    return group_idx


# ---------------------------------------------------------------------------
# Deterministic parameter init (Conv2d 1x1 + eval-mode BatchNorm2d, folded)
# Weights channels-first [Cout, Cin]; biases [Cout, 1].
# ---------------------------------------------------------------------------
def make_branch_params(key, in_ch, mlp, eps=1e-5):
    ws, bs = [], []
    c_prev = in_ch
    for c_out in mlp:
        key, kw, kb, kg, kbe, km, kv = jax.random.split(key, 7)
        w = 0.1 * jax.random.normal(kw, (c_out, c_prev), dtype=jnp.float32)
        b = 0.1 * jax.random.normal(kb, (c_out,), dtype=jnp.float32)
        gamma = 1.0 + 0.1 * jax.random.normal(kg, (c_out,), dtype=jnp.float32)
        beta = 0.1 * jax.random.normal(kbe, (c_out,), dtype=jnp.float32)
        mean = 0.1 * jax.random.normal(km, (c_out,), dtype=jnp.float32)
        var = 1.0 + 0.1 * jax.random.uniform(kv, (c_out,), dtype=jnp.float32)
        scale = gamma / jnp.sqrt(var + eps)
        w_eff = w * scale[:, None]                              # [Cout, Cin]
        b_eff = (b - mean) * scale + beta                       # [Cout]
        ws.append(w_eff)
        bs.append(b_eff.reshape(c_out, 1))
        c_prev = c_out
    return key, ws, bs


# ---------------------------------------------------------------------------
# Full forward, mirroring PointNetSetAbstractionMsg1.forward
# ---------------------------------------------------------------------------
def set_abstraction_msg_forward(xyz_bcn, points_bdn, params, npoint,
                                radius_list, nsample_list):
    B, _, N = xyz_bcn.shape
    D = points_bdn.shape[1]
    S = npoint
    M = B * S
    M_pad = _round_up(M, 128)            # lane-dense group axis (pad -> slice)

    xyz = jnp.transpose(xyz_bcn, (0, 2, 1))                     # [B, N, 3]
    fps_idx = farthest_point_sample(xyz, S)                     # [B, S]
    new_xyz = index_points(xyz, fps_idx)                        # [B, S, 3]

    # squared distances (shared across all radii / branches)
    diff = new_xyz[:, :, None, :] - xyz[:, None, :, :]
    sqrdists = jnp.sum(diff * diff, axis=-1)                    # [B, S, N]

    cin = D + 3
    cin_pad = _round_up(cin + 1, 8)      # +1 constant "bias" channel, pad to 8

    # flat (padded) group -> batch index / fps index, shared by all branches
    m_ids = jnp.arange(M_pad, dtype=jnp.int32)
    b_flat = jnp.minimum(m_ids // S, B - 1)                     # [M_pad]
    fps_flat = jnp.pad(fps_idx.reshape(M), (0, M_pad - M))      # [M_pad]

    # fuse branches sharing the same nsample into one pallas_call
    groups = {}
    for bi, ns in enumerate(nsample_list):
        groups.setdefault(ns, []).append(bi)

    d_sel = jnp.arange(D, dtype=jnp.int32)[None, :, None, None]
    x4_sel = jnp.arange(3, dtype=jnp.int32)[None, :, None, None]
    x3_sel = jnp.arange(3, dtype=jnp.int32)[None, :, None]

    branch_out = [None] * len(nsample_list)
    for ns, bidx in groups.items():
        K = ns
        c1m = _round_up(max(params[b][0][0].shape[0] for b in bidx), 8)
        c2m = _round_up(max(params[b][0][1].shape[0] for b in bidx), 8)
        c3m = _round_up(max(params[b][0][2].shape[0] for b in bidx), 8)
        tm = _pick_tm(M_pad, K, cin_pad, (c1m, c2m, c3m), nb=len(bidx))
        n_blocks = M_pad // tm

        b_blk = b_flat.reshape(n_blocks, tm)                    # [nblk, tm]
        fps_blk = fps_flat.reshape(n_blocks, tm)                # [nblk, tm]
        # centroid coords, gathered directly into blocked channels-first layout
        ctr_xyz = xyz_bcn[b_blk[:, None, :], x3_sel, fps_blk[:, None, :]]   # [nblk,3,tm]

        xs = []
        for b in bidx:
            group_idx = ball_query_indices(sqrdists, radius_list[b], K)     # [B,S,K]
            gi = jnp.pad(group_idx.reshape(M, K), ((0, M_pad - M), (0, 0)))
            gi_blk = gi.reshape(n_blocks, tm, K).transpose(0, 2, 1)         # [nblk,K,tm]

            # Gather directly into the blocked kernel layout (no separate
            # full-tensor transpose pass over the dominant tensor).
            bsel = b_blk[:, None, None, :]                                  # [nblk,1,1,tm]
            nsel = gi_blk[:, None, :, :]                                    # [nblk,1,K,tm]
            g_pts = points_bdn[bsel, d_sel, nsel]                           # [nblk,D,K,tm]
            g_xyz = xyz_bcn[bsel, x4_sel, nsel] - ctr_xyz[:, :, None, :]    # [nblk,3,K,tm]

            pieces = [g_pts.astype(jnp.float32), g_xyz.astype(jnp.float32),
                      jnp.ones((n_blocks, 1, K, tm), jnp.float32)]          # bias channel
            zpad = cin_pad - cin - 1
            if zpad:
                pieces.append(jnp.zeros((n_blocks, zpad, K, tm), jnp.float32))
            x = jnp.concatenate(pieces, axis=1)                             # [nblk,cin_pad,K,tm]
            xs.append(x.reshape(n_blocks, cin_pad, K * tm))                 # free dim merge
        x_stack = jnp.stack(xs, axis=0)                                     # [nb,nblk,cin_pad,K*tm]

        # stacked, zero-padded weights; layer-1 bias folded into W1's bias column
        w1s, w2s, w3s, b2s, b3s = [], [], [], [], []
        for b in bidx:
            (w1, w2, w3), (b1, b2, b3) = params[b]
            w1a = jnp.zeros((c1m, cin_pad), jnp.float32)
            w1a = w1a.at[:w1.shape[0], :cin].set(w1)
            w1a = w1a.at[:w1.shape[0], cin].set(b1[:, 0])       # bias column (x channel == 1.0)
            w1s.append(w1a)
            w2s.append(_pad2(w2, (c2m, c1m)))
            b2s.append(_pad2(b2, (c2m, 1)))
            w3s.append(_pad2(w3, (c3m, c2m)))
            b3s.append(_pad2(b3, (c3m, 1)))

        out = msg_group_pallas(x_stack, jnp.stack(w1s), jnp.stack(w2s),
                               jnp.stack(b2s), jnp.stack(w3s), jnp.stack(b3s),
                               tm=tm, K=K)                                  # [nb,c3m,M_pad]

        for j, b in enumerate(bidx):
            c3_b = params[b][0][2].shape[0]
            ob = out[j, :c3_b, :M].reshape(c3_b, B, S).transpose(1, 0, 2)
            branch_out[b] = ob                                              # [B, C3, S]

    new_xyz_out = jnp.transpose(new_xyz, (0, 2, 1))                         # [B, 3, S]
    new_points_concat = jnp.concatenate(branch_out, axis=1)                 # [B, sum C3, S]
    return new_xyz_out, new_points_concat


# ---------------------------------------------------------------------------
# Pure-JAX reference (naive layout) for correctness sanity check
# ---------------------------------------------------------------------------
def reference_forward(xyz_bcn, points_bdn, params, npoint, radius_list,
                      nsample_list):
    xyz = jnp.transpose(xyz_bcn, (0, 2, 1))                     # [B, N, 3]
    points = jnp.transpose(points_bdn, (0, 2, 1))               # [B, N, D]
    fps_idx = farthest_point_sample(xyz, npoint)
    new_xyz = index_points(xyz, fps_idx)                        # [B, S, 3]
    diff = new_xyz[:, :, None, :] - xyz[:, None, :, :]
    sqrdists = jnp.sum(diff * diff, axis=-1)

    outs = []
    for b, (radius, nsample) in enumerate(zip(radius_list, nsample_list)):
        gidx = ball_query_indices(sqrdists, radius, nsample)    # [B, S, K]
        g_xyz = index_points(xyz, gidx) - new_xyz[:, :, None, :]
        g_pts = index_points(points, gidx)
        h = jnp.concatenate([g_pts, g_xyz], axis=-1)            # [B, S, K, Cin]
        (w1, w2, w3), (b1, b2, b3) = params[b]
        for w, bb in ((w1, b1), (w2, b2), (w3, b3)):
            h = jnp.einsum('bskc,oc->bsko', h, w) + bb[:, 0]
            h = jnp.maximum(h, 0.0)
        outs.append(jnp.max(h, axis=2).transpose(0, 2, 1))      # [B, C3, S]
    return jnp.transpose(new_xyz, (0, 2, 1)), jnp.concatenate(outs, axis=1)


# ---------------------------------------------------------------------------
if __name__ == "__main__":
    B, N, D = 2, 64, 4               # batch, num points, feature channels
    npoint = 16
    radius_list = [0.2, 0.4, 0.8]
    nsample_list = [8, 8, 16]
    mlp_list = [[8, 8, 16], [8, 16, 16], [8, 8, 32]]

    # deterministic inputs
    k_xyz, k_pts = jax.random.split(jax.random.PRNGKey(0))
    xyz = jax.random.uniform(k_xyz, (B, 3, N), dtype=jnp.float32)
    points = jax.random.normal(k_pts, (B, D, N), dtype=jnp.float32)

    # deterministic parameters (Conv2d 1x1 + folded eval-mode BatchNorm2d)
    pkey = jax.random.PRNGKey(1234)
    params = []
    for mlp in mlp_list:
        pkey, ws, bs = make_branch_params(pkey, D + 3, mlp)
        params.append((ws, bs))

    new_xyz, new_points = set_abstraction_msg_forward(
        xyz, points, params, npoint, radius_list, nsample_list)
    jax.block_until_ready((new_xyz, new_points))

    assert new_xyz.shape == (B, 3, npoint)
    assert new_points.shape == (B, sum(m[-1] for m in mlp_list), npoint)
    assert bool(jnp.all(jnp.isfinite(new_points)))

    # sanity check against a naive pure-JAX reference (loose tol: MXU default
    # precision differs from XLA f32 dot)
    ref_xyz, ref_points = reference_forward(
        xyz, points, params, npoint, radius_list, nsample_list)
    assert bool(jnp.allclose(new_xyz, ref_xyz, atol=1e-5, rtol=1e-5))
    assert bool(jnp.allclose(new_points, ref_points, atol=3e-2, rtol=3e-2))

    print("KERNEL_OK")
</pallas_src>

<mosaic_0001>
module attributes {stable_mosaic.version = 11 : i64} {
  func.func @_msg_fused_kernel(%arg0: i32, %arg1: i32, %arg2: memref<1x1x8x1024xf32, #tpu.memory_space<vmem>>, %arg3: memref<1x8x8xf32, #tpu.memory_space<vmem>>, %arg4: memref<1x16x8xf32, #tpu.memory_space<vmem>>, %arg5: memref<1x16x1xf32, #tpu.memory_space<vmem>>, %arg6: memref<1x16x16xf32, #tpu.memory_space<vmem>>, %arg7: memref<1x16x1xf32, #tpu.memory_space<vmem>>, %arg8: memref<1x16x128xf32, #tpu.memory_space<vmem>>) attributes {dimension_semantics = [#tpu.dimension_semantics<parallel>, #tpu.dimension_semantics<parallel>], iteration_bounds = array<i64: 2, 1>, scalar_prefetch = 0 : i64, scratch_operands = 0 : i64, tpu.core_type = #tpu.core_type<tc>, window_params = [{transform_indices = @transform_0, window_bounds = array<i64: 1, 1, 8, 1024>}, {transform_indices = @transform_1, window_bounds = array<i64: 1, 8, 8>}, {transform_indices = @transform_2, window_bounds = array<i64: 1, 16, 8>}, {transform_indices = @transform_3, window_bounds = array<i64: 1, 16, 1>}, {transform_indices = @transform_4, window_bounds = array<i64: 1, 16, 16>}, {transform_indices = @transform_5, window_bounds = array<i64: 1, 16, 1>}, {transform_indices = @transform_6, window_bounds = array<i64: 1, 16, 128>}]} {
    %c0 = arith.constant 0 : index
    %c0_0 = arith.constant 0 : index
    %c0_1 = arith.constant 0 : index
    %c0_2 = arith.constant 0 : index
    %0 = vector.load %arg2[%c0, %c0_0, %c0_1, %c0_2] : memref<1x1x8x1024xf32, #tpu.memory_space<vmem>>, vector<1x1x8x1024xf32>
    %1 = vector.shape_cast %0 : vector<1x1x8x1024xf32> to vector<8x1024xf32>
    %c0_3 = arith.constant 0 : index
    %c0_4 = arith.constant 0 : index
    %c0_5 = arith.constant 0 : index
    %2 = vector.load %arg3[%c0_3, %c0_4, %c0_5] : memref<1x8x8xf32, #tpu.memory_space<vmem>>, vector<1x8x8xf32>
    %3 = vector.shape_cast %2 : vector<1x8x8xf32> to vector<8x8xf32>
    %cst = arith.constant dense<0.000000e+00> : vector<8x1024xf32>
    %4 = tpu.matmul %3, %1, %cst {dimension_numbers = #tpu.dot_dimension_numbers<[1], [0], [0], [1], [0, 0, 1, 1], [], []>} : vector<8x8xf32>, vector<8x1024xf32>, vector<8x1024xf32> -> vector<8x1024xf32>
    %cst_6 = arith.constant 0.000000e+00 : f32
    %5 = vector.broadcast %cst_6 : f32 to vector<8x1024xf32>
    %6 = arith.maximumf %4, %5 : vector<8x1024xf32>
    %c0_7 = arith.constant 0 : index
    %c0_8 = arith.constant 0 : index
    %c0_9 = arith.constant 0 : index
    %7 = vector.load %arg4[%c0_7, %c0_8, %c0_9] : memref<1x16x8xf32, #tpu.memory_space<vmem>>, vector<1x16x8xf32>
    %8 = vector.shape_cast %7 : vector<1x16x8xf32> to vector<16x8xf32>
    %cst_10 = arith.constant dense<0.000000e+00> : vector<16x1024xf32>
    %9 = tpu.matmul %8, %6, %cst_10 {dimension_numbers = #tpu.dot_dimension_numbers<[1], [0], [0], [1], [0, 0, 1, 1], [], []>} : vector<16x8xf32>, vector<8x1024xf32>, vector<16x1024xf32> -> vector<16x1024xf32>
    %c0_11 = arith.constant 0 : index
    %c0_12 = arith.constant 0 : index
    %c0_13 = arith.constant 0 : index
    %10 = vector.load %arg5[%c0_11, %c0_12, %c0_13] : memref<1x16x1xf32, #tpu.memory_space<vmem>>, vector<1x16x1xf32>
    %11 = vector.shape_cast %10 : vector<1x16x1xf32> to vector<16x1xf32>
    %12 = vector.broadcast %11 : vector<16x1xf32> to vector<16x1024xf32>
    %13 = arith.addf %9, %12 : vector<16x1024xf32>
    %cst_14 = arith.constant 0.000000e+00 : f32
    %14 = vector.broadcast %cst_14 : f32 to vector<16x1024xf32>
    %15 = arith.maximumf %13, %14 : vector<16x1024xf32>
    %c0_15 = arith.constant 0 : index
    %c0_16 = arith.constant 0 : index
    %c0_17 = arith.constant 0 : index
    %16 = vector.load %arg6[%c0_15, %c0_16, %c0_17] : memref<1x16x16xf32, #tpu.memory_space<vmem>>, vector<1x16x16xf32>
    %17 = vector.shape_cast %16 : vector<1x16x16xf32> to vector<16x16xf32>
    %cst_18 = arith.constant dense<0.000000e+00> : vector<16x1024xf32>
    %18 = tpu.matmul %17, %15, %cst_18 {dimension_numbers = #tpu.dot_dimension_numbers<[1], [0], [0], [1], [0, 0, 1, 1], [], []>} : vector<16x16xf32>, vector<16x1024xf32>, vector<16x1024xf32> -> vector<16x1024xf32>
    %c0_19 = arith.constant 0 : index
    %c0_20 = arith.constant 0 : index
    %c0_21 = arith.constant 0 : index
    %19 = vector.load %arg7[%c0_19, %c0_20, %c0_21] : memref<1x16x1xf32, #tpu.memory_space<vmem>>, vector<1x16x1xf32>
    %20 = vector.shape_cast %19 : vector<1x16x1xf32> to vector<16x1xf32>
    %21 = vector.broadcast %20 : vector<16x1xf32> to vector<16x1024xf32>
    %22 = arith.addf %18, %21 : vector<16x1024xf32>
    %cst_22 = arith.constant 0.000000e+00 : f32
    %23 = vector.broadcast %cst_22 : f32 to vector<16x1024xf32>
    %24 = arith.maximumf %22, %23 : vector<16x1024xf32>
    %25 = vector.extract_strided_slice %24 {offsets = [0, 0], sizes = [16, 128], strides = [1, 1]} : vector<16x1024xf32> to vector<16x128xf32>
    %26 = vector.extract_strided_slice %24 {offsets = [0, 128], sizes = [16, 128], strides = [1, 1]} : vector<16x1024xf32> to vector<16x128xf32>
    %27 = arith.maximumf %25, %26 : vector<16x128xf32>
    %28 = vector.extract_strided_slice %24 {offsets = [0, 256], sizes = [16, 128], strides = [1, 1]} : vector<16x1024xf32> to vector<16x128xf32>
    %29 = arith.maximumf %27, %28 : vector<16x128xf32>
    %30 = vector.extract_strided_slice %24 {offsets = [0, 384], sizes = [16, 128], strides = [1, 1]} : vector<16x1024xf32> to vector<16x128xf32>
    %31 = arith.maximumf %29, %30 : vector<16x128xf32>
    %32 = vector.extract_strided_slice %24 {offsets = [0, 512], sizes = [16, 128], strides = [1, 1]} : vector<16x1024xf32> to vector<16x128xf32>
    %33 = arith.maximumf %31, %32 : vector<16x128xf32>
    %34 = vector.extract_strided_slice %24 {offsets = [0, 640], sizes = [16, 128], strides = [1, 1]} : vector<16x1024xf32> to vector<16x128xf32>
    %35 = arith.maximumf %33, %34 : vector<16x128xf32>
    %36 = vector.extract_strided_slice %24 {offsets = [0, 768], sizes = [16, 128], strides = [1, 1]} : vector<16x1024xf32> to vector<16x128xf32>
    %37 = arith.maximumf %35, %36 : vector<16x128xf32>
    %38 = vector.extract_strided_slice %24 {offsets = [0, 896], sizes = [16, 128], strides = [1, 1]} : vector<16x1024xf32> to vector<16x128xf32>
    %39 = arith.maximumf %37, %38 : vector<16x128xf32>
    %c0_23 = arith.constant 0 : index
    %c0_24 = arith.constant 0 : index
    %c0_25 = arith.constant 0 : index
    %40 = vector.load %arg8[%c0_23, %c0_24, %c0_25] : memref<1x16x128xf32, #tpu.memory_space<vmem>>, vector<1x16x128xf32>
    %41 = vector.shape_cast %40 : vector<1x16x128xf32> to vector<16x128xf32>
    %42 = vector.shape_cast %39 : vector<16x128xf32> to vector<1x16x128xf32>
    tpu.vector_store %arg8[%c0_23, %c0_24, %c0_25], %42 {strides = array<i32>} : memref<1x16x128xf32, #tpu.memory_space<vmem>>, vector<1x16x128xf32>,
    return
  }
  func.func @transform_0(%arg0: i32, %arg1: i32) -> (i32, i32, i32, i32) {
    %c0_i32 = arith.constant 0 : i32
    %c0_i32_0 = arith.constant 0 : i32
    %c0_i32_1 = arith.constant 0 : i32
    return %arg0, %arg1, %c0_i32, %c0_i32_0 : i32, i32, i32, i32
  }
  func.func @transform_1(%arg0: i32, %arg1: i32) -> (i32, i32, i32) {
    %c0_i32 = arith.constant 0 : i32
    %c0_i32_0 = arith.constant 0 : i32
    %c0_i32_1 = arith.constant 0 : i32
    return %arg0, %c0_i32, %c0_i32_0 : i32, i32, i32
  }
  func.func @transform_2(%arg0: i32, %arg1: i32) -> (i32, i32, i32) {
    %c0_i32 = arith.constant 0 : i32
    %c0_i32_0 = arith.constant 0 : i32
    %c0_i32_1 = arith.constant 0 : i32
    return %arg0, %c0_i32, %c0_i32_0 : i32, i32, i32
  }
  func.func @transform_3(%arg0: i32, %arg1: i32) -> (i32, i32, i32) {
    %c0_i32 = arith.constant 0 : i32
    %c0_i32_0 = arith.constant 0 : i32
    %c0_i32_1 = arith.constant 0 : i32
    return %arg0, %c0_i32, %c0_i32_0 : i32, i32, i32
  }
  func.func @transform_4(%arg0: i32, %arg1: i32) -> (i32, i32, i32) {
    %c0_i32 = arith.constant 0 : i32
    %c0_i32_0 = arith.constant 0 : i32
    %c0_i32_1 = arith.constant 0 : i32
    return %arg0, %c0_i32, %c0_i32_0 : i32, i32, i32
  }
  func.func @transform_5(%arg0: i32, %arg1: i32) -> (i32, i32, i32) {
    %c0_i32 = arith.constant 0 : i32
    %c0_i32_0 = arith.constant 0 : i32
    %c0_i32_1 = arith.constant 0 : i32
    return %arg0, %c0_i32, %c0_i32_0 : i32, i32, i32
  }
  func.func @transform_6(%arg0: i32, %arg1: i32) -> (i32, i32, i32) {
    %c0_i32 = arith.constant 0 : i32
    %c0_i32_0 = arith.constant 0 : i32
    return %arg0, %c0_i32, %arg1 : i32, i32, i32
  }
}

</mosaic_0001>

<llo_original>
// kernel: tpu_custom_call.1
$region0: #{tpu_custom_call.1}
  #allocation0 [shape = 'u32[]', space=smem, size = 0x4, offset = 0x4, fixed_abs, tag = 'smem constant byte address 0x4 - core index']
  #allocation1 [shape = 'u32[144,128]{1,0:T(1,128)}', space=vmem, size = 0x12000, scoped, tag = 'internal scratch']
  %s0 = inlined_call_operand.hbm [shape: f32[2,1,8,1024], index: 0, kind: input, shape index: {}]
  %s1 = inlined_call_operand.vmem [shape: f32[2,8,8], index: 1, kind: input, shape index: {}]
  %s2 = inlined_call_operand.vmem [shape: f32[2,16,8], index: 2, kind: input, shape index: {}]
  %s3 = inlined_call_operand.vmem [shape: f32[2,16,1], index: 3, kind: input, shape index: {}]
  %s4 = inlined_call_operand.vmem [shape: f32[2,16,16], index: 4, kind: input, shape index: {}]
  %s5 = inlined_call_operand.vmem [shape: f32[2,16,1], index: 5, kind: input, shape index: {}]
  %s6 = inlined_call_operand.hbm [shape: f32[2,16,128], index: 6, kind: output, shape index: {}]
  %s7 = sld [smem:[#allocation0]]
  $region61: #{tpu_custom_call.1} parent=0
    _
  %s9 = ssub.s32 1, %s7
  %s10 = scalar_select 0, %s9, %s7
  $region1: #{tpu_custom_call.1} parent=0
    #allocation2 [shape = 'u8[65536]{0}', space=vmem, size = 0x10000, scoped, tag = 'input window, operand 0']
    #allocation3 [shape = 's32[2]{0}', space=sflag, size = 0x8, scoped, tag = 'scoped memory for tpu_custom_call.1']
    #allocation4 [shape = 's32[2]{0}', space=sflag, size = 0x8, scoped, tag = 'scoped memory for tpu_custom_call.1']
    #allocation5 [shape = 'u8[16384]{0}', space=vmem, size = 0x4000, scoped, tag = 'output window, operand 0']
    %11 = vsyncpa [#allocation3], 0
    %s12 = scalar_lea.sflag [#allocation3], 1
    %13 = vsyncpa %s12, 0
    %14 = vsyncpa [#allocation4], 0
    %s15 = scalar_lea.sflag [#allocation4], 1
    %16 = vsyncpa %s15, 0
    loop: start=0, step=1, limit=4
    $region2: #{tpu_custom_call.1} parent=1 // loop_pre_header
      _
    $region3: #{tpu_custom_call.1} parent=1 // loop_header
      %s18 = sphi 0, %s22
      %p19 = scmp.ge.s32.totalorder %s18, 4
      %s25 = sphi 0, %s37
      %s26 = sphi 0, %s33
      %s27 = sphi 0, %s25
      %s28 = sphi 0, %s26
      %s29 = sphi 0, %s27
      %s30 = sphi 0, %s28
      %s42 = sphi 0, %s44
      %s45 = sphi 0, %s42
      %s46 = sphi 0, %s45
      %s62 = sphi 0, %s46
      %s68 = sphi 0, %s70
      %s71 = sphi 0, %s68
      %s72 = sphi 0, %s71
      %s88 = sphi 0, %s72
      %s94 = sphi 0, %s96
      %s97 = sphi 0, %s94
      %s98 = sphi 0, %s97
      %s114 = sphi 0, %s98
      %s120 = sphi 0, %s122
      %s123 = sphi 0, %s120
      %s124 = sphi 0, %s123
      %s140 = sphi 0, %s124
      %s146 = sphi 0, %s148
      %s149 = sphi 0, %s146
      %s150 = sphi 0, %s149
      %s166 = sphi 0, %s150
      %s172 = sphi 0, %s174
      %s175 = sphi 0, %s172
      %s176 = sphi 0, %s175
      %s192 = sphi 0, %s176
      %s200 = sphi 0, %s202
      %s203 = sphi 0, %s200
      %s204 = sphi 0, %s203
      %s220 = sphi 0, %s204
    $region4: #{tpu_custom_call.1} parent=1 // loop_header_branch
      %21 = sbr.rel (%p19) target = $region8
    $region5: #{tpu_custom_call.1} parent=1 // loop_body
      %s23 = ssub.s32 %s18, 1
      %s24 = ssub.s32 %s18, 2
      %s31 = sadd.s32 1, %s26
      %p32 = scmp.ge.s32.totalorder %s31, 1
      %s33 = scalar_select %p32, 0, %s31
      %s34 = sadd.s32 1, %s25
      %s35 = scalar_select %p32, %s34, %s25
      %p36 = scmp.ge.s32.totalorder %s35, 2
      %s37 = scalar_select %p36, 0, %s35
      %s38 = ssub.s32 %s25, %s37
      %s39 = ssub.s32 %s26, %s33
      %s40 = sor.u32 %s38, %s39
      %p41 = scmp.eq.s32.totalorder %s40, 0
      %s43 = sadd.s32 %s42, 1
      %s44 = scalar_select %p41, %s42, %s43
      %p47 = pneg %p41
      %p48 = scmp.eq.s32.totalorder %s18, 1
      %p49 = por %p47, %p48
      %p50 = scmp.ne.s32.totalorder %s42, %s45
      %p51 = scmp.eq.s32.totalorder %s18, 0
      %p52 = por %p50, %p51
      %p53 = scmp.ne.s32.totalorder %s42, %s45
      %p54 = scmp.eq.s32.totalorder %s23, 1
      %p55 = por %p53, %p54
      %p56 = scmp.ne.s32.totalorder %s45, %s46
      %p57 = scmp.eq.s32.totalorder %s23, 0
      %p58 = por %p56, %p57
      %p59 = scmp.ne.s32.totalorder %s45, %s46
      %p60 = scmp.eq.s32.totalorder %s24, 1
      %p61 = por %p59, %p60
      %p63 = scmp.ne.s32.totalorder %s46, %s62
      %p64 = scmp.eq.s32.totalorder %s24, 0
      %p65 = por %p63, %p64
      %s66 = ssub.s32 %s25, %s37
      %p67 = scmp.eq.s32.totalorder %s66, 0
      %s69 = sadd.s32 %s68, 1
      %s70 = scalar_select %p67, %s68, %s69
      %p73 = pneg %p67
      %p74 = scmp.eq.s32.totalorder %s18, 1
      %p75 = por %p73, %p74
      %p76 = scmp.ne.s32.totalorder %s68, %s71
      %p77 = scmp.eq.s32.totalorder %s18, 0
      %p78 = por %p76, %p77
      %p79 = scmp.ne.s32.totalorder %s68, %s71
      %p80 = scmp.eq.s32.totalorder %s23, 1
      %p81 = por %p79, %p80
      %p82 = scmp.ne.s32.totalorder %s71, %s72
      %p83 = scmp.eq.s32.totalorder %s23, 0
      %p84 = por %p82, %p83
      %p85 = scmp.ne.s32.totalorder %s71, %s72
      %p86 = scmp.eq.s32.totalorder %s24, 1
      %p87 = por %p85, %p86
      %p89 = scmp.ne.s32.totalorder %s72, %s88
      %p90 = scmp.eq.s32.totalorder %s24, 0
      %p91 = por %p89, %p90
      %s92 = ssub.s32 %s25, %s37
      %p93 = scmp.eq.s32.totalorder %s92, 0
      %s95 = sadd.s32 %s94, 1
      %s96 = scalar_select %p93, %s94, %s95
      %p99 = pneg %p93
      %p100 = scmp.eq.s32.totalorder %s18, 1
      %p101 = por %p99, %p100
      %p102 = scmp.ne.s32.totalorder %s94, %s97
      %p103 = scmp.eq.s32.totalorder %s18, 0
      %p104 = por %p102, %p103
      %p105 = scmp.ne.s32.totalorder %s94, %s97
      %p106 = scmp.eq.s32.totalorder %s23, 1
      %p107 = por %p105, %p106
      %p108 = scmp.ne.s32.totalorder %s97, %s98
      %p109 = scmp.eq.s32.totalorder %s23, 0
      %p110 = por %p108, %p109
      %p111 = scmp.ne.s32.totalorder %s97, %s98
      %p112 = scmp.eq.s32.totalorder %s24, 1
      %p113 = por %p111, %p112
      %p115 = scmp.ne.s32.totalorder %s98, %s114
      %p116 = scmp.eq.s32.totalorder %s24, 0
      %p117 = por %p115, %p116
      %s118 = ssub.s32 %s25, %s37
      %p119 = scmp.eq.s32.totalorder %s118, 0
      %s121 = sadd.s32 %s120, 1
      %s122 = scalar_select %p119, %s120, %s121
      %p125 = pneg %p119
      %p126 = scmp.eq.s32.totalorder %s18, 1
      %p127 = por %p125, %p126
      %p128 = scmp.ne.s32.totalorder %s120, %s123
      %p129 = scmp.eq.s32.totalorder %s18, 0
      %p130 = por %p128, %p129
      %p131 = scmp.ne.s32.totalorder %s120, %s123
      %p132 = scmp.eq.s32.totalorder %s23, 1
      %p133 = por %p131, %p132
      %p134 = scmp.ne.s32.totalorder %s123, %s124
      %p135 = scmp.eq.s32.totalorder %s23, 0
      %p136 = por %p134, %p135
      %p137 = scmp.ne.s32.totalorder %s123, %s124
      %p138 = scmp.eq.s32.totalorder %s24, 1
      %p139 = por %p137, %p138
      %p141 = scmp.ne.s32.totalorder %s124, %s140
      %p142 = scmp.eq.s32.totalorder %s24, 0
      %p143 = por %p141, %p142
      %s144 = ssub.s32 %s25, %s37
      %p145 = scmp.eq.s32.totalorder %s144, 0
      %s147 = sadd.s32 %s146, 1
      %s148 = scalar_select %p145, %s146, %s147
      %p151 = pneg %p145
      %p152 = scmp.eq.s32.totalorder %s18, 1
      %p153 = por %p151, %p152
      %p154 = scmp.ne.s32.totalorder %s146, %s149
      %p155 = scmp.eq.s32.totalorder %s18, 0
      %p156 = por %p154, %p155
      %p157 = scmp.ne.s32.totalorder %s146, %s149
      %p158 = scmp.eq.s32.totalorder %s23, 1
      %p159 = por %p157, %p158
      %p160 = scmp.ne.s32.totalorder %s149, %s150
      %p161 = scmp.eq.s32.totalorder %s23, 0
      %p162 = por %p160, %p161
      %p163 = scmp.ne.s32.totalorder %s149, %s150
      %p164 = scmp.eq.s32.totalorder %s24, 1
      %p165 = por %p163, %p164
      %p167 = scmp.ne.s32.totalorder %s150, %s166
      %p168 = scmp.eq.s32.totalorder %s24, 0
      %p169 = por %p167, %p168
      %s170 = ssub.s32 %s25, %s37
      %p171 = scmp.eq.s32.totalorder %s170, 0
      %s173 = sadd.s32 %s172, 1
      %s174 = scalar_select %p171, %s172, %s173
      %p177 = pneg %p171
      %p178 = scmp.eq.s32.totalorder %s18, 1
      %p179 = por %p177, %p178
      %p180 = scmp.ne.s32.totalorder %s172, %s175
      %p181 = scmp.eq.s32.totalorder %s18, 0
      %p182 = por %p180, %p181
      %p183 = scmp.ne.s32.totalorder %s172, %s175
      %p184 = scmp.eq.s32.totalorder %s23, 1
      %p185 = por %p183, %p184
      %p186 = scmp.ne.s32.totalorder %s175, %s176
      %p187 = scmp.eq.s32.totalorder %s23, 0
      %p188 = por %p186, %p187
      %p189 = scmp.ne.s32.totalorder %s175, %s176
      %p190 = scmp.eq.s32.totalorder %s24, 1
      %p191 = por %p189, %p190
      %p193 = scmp.ne.s32.totalorder %s176, %s192
      %p194 = scmp.eq.s32.totalorder %s24, 0
      %p195 = por %p193, %p194
      %s196 = ssub.s32 %s25, %s37
      %s197 = ssub.s32 %s26, %s33
      %s198 = sor.u32 %s196, %s197
      %p199 = scmp.eq.s32.totalorder %s198, 0
      %s201 = sadd.s32 %s200, 1
      %s202 = scalar_select %p199, %s200, %s201
      %p205 = pneg %p199
      %p206 = scmp.eq.s32.totalorder %s18, 1
      %p207 = por %p205, %p206
      %p208 = scmp.ne.s32.totalorder %s200, %s203
      %p209 = scmp.eq.s32.totalorder %s18, 0
      %p210 = por %p208, %p209
      %p211 = scmp.ne.s32.totalorder %s200, %s203
      %p212 = scmp.eq.s32.totalorder %s23, 1
      %p213 = por %p211, %p212
      %p214 = scmp.ne.s32.totalorder %s203, %s204
      %p215 = scmp.eq.s32.totalorder %s23, 0
      %p216 = por %p214, %p215
      %p217 = scmp.ne.s32.totalorder %s203, %s204
      %p218 = scmp.eq.s32.totalorder %s24, 1
      %p219 = por %p217, %p218
      %p221 = scmp.ne.s32.totalorder %s204, %s220
      %p222 = scmp.eq.s32.totalorder %s24, 0
      %p223 = por %p221, %p222
      %p224 = scmp.le.s32.totalorder 1, %s18
      %p225 = scmp.lt.s32.totalorder %s18, 3
      %p226 = pnand %p224, %p225
      %p227 = pneg %p226
      // Predicated region
      $region9: #{tpu_custom_call.1} parent=5 // pred_check
        _
      $region10: #{tpu_custom_call.1} parent=5 // pred_check_branch
        %229 = sbr.rel (%p226) target = $region12
      $region11: #{tpu_custom_call.1} parent=5 // pred_region
        %s230 = ssub.s32 %s18, 1
      $region12: #{tpu_custom_call.1} parent=5 // pred_fallthru
        _
      %p231 = scmp.lt.s32.totalorder %s18, 2
      // Predicated region
      $region13: #{tpu_custom_call.1} parent=5 // pred_check
        %p232 = pneg %p231
      $region14: #{tpu_custom_call.1} parent=5 // pred_check_branch
        %234 = sbr.rel (%p232) target = $region16
      $region15: #{tpu_custom_call.1} parent=5 // pred_region
        // Predicated region
        $region17: #{tpu_custom_call.1} parent=15 // pred_check
          %p235 = pneg %p52
        $region18: #{tpu_custom_call.1} parent=15 // pred_check_branch
          %237 = sbr.rel (%p235) target = $region20
        $region19: #{tpu_custom_call.1} parent=15 // pred_region
          %s238 = sand.u32 %s42, 1
          %s239 = scalar_lea.sflag [#allocation3], %s238
          %s240 = sand.u32 %s42, 1
          %s241 = smul.addr %s240, 64
          %s242 = scalar_lea.vmem [#allocation2], %s241
          %s244 = ssub.s32 1024, 1024
          %245 = vsyncadd %s239, %s244
          %s246 = smul.addr %s26, 8
          %s247 = smul.addr %s25, 8
          %s248 = sadd.s32 %s246, %s247
          %s249 = smul.addr %s248, 128
          %s250 = scalar_lea.hbm %s0, %s249
          %s252 = sshll.u32 %s242, 4
          %s253 = int_to_ptr.vmem [resolvable:$true] %s252
          %255 = dma.hbm_to_vmem [thread:$0]  %s250, 1024, %s253, %s239
        $region20: #{tpu_custom_call.1} parent=15 // pred_fallthru
          _
        // Predicated region
        $region21: #{tpu_custom_call.1} parent=15 // pred_check
          %p256 = pneg %p78
        $region22: #{tpu_custom_call.1} parent=15 // pred_check_branch
          %258 = sbr.rel (%p256) target = $region24
        $region23: #{tpu_custom_call.1} parent=15 // pred_region
          %p259 = scmp.lt.s32.totalorder %s25, 1
          %s260 = scalar_select %p259, %s25, 1
          %s261 = smul.addr %s260, 8
          %s262 = scalar_lea.vmem %s1, %s261
        $region24: #{tpu_custom_call.1} parent=15 // pred_fallthru
          _
        // Predicated region
        $region25: #{tpu_custom_call.1} parent=15 // pred_check
          %p263 = pneg %p104
        $region26: #{tpu_custom_call.1} parent=15 // pred_check_branch
          %265 = sbr.rel (%p263) target = $region28
        $region27: #{tpu_custom_call.1} parent=15 // pred_region
          %p266 = scmp.lt.s32.totalorder %s25, 1
          %s267 = scalar_select %p266, %s25, 1
          %s268 = smul.addr %s267, 2
          %s269 = smul.addr %s268, 8
          %s270 = scalar_lea.vmem %s2, %s269
        $region28: #{tpu_custom_call.1} parent=15 // pred_fallthru
          _
        // Predicated region
        $region29: #{tpu_custom_call.1} parent=15 // pred_check
          %p271 = pneg %p130
        $region30: #{tpu_custom_call.1} parent=15 // pred_check_branch
          %273 = sbr.rel (%p271) target = $region32
        $region31: #{tpu_custom_call.1} parent=15 // pred_region
          %p274 = scmp.lt.s32.totalorder %s25, 1
          %s275 = scalar_select %p274, %s25, 1
          %s276 = smul.addr %s275, 2
          %s277 = smul.addr %s276, 8
          %s278 = scalar_lea.vmem %s3, %s277
        $region32: #{tpu_custom_call.1} parent=15 // pred_fallthru
          _
        // Predicated region
        $region33: #{tpu_custom_call.1} parent=15 // pred_check
          %p279 = pneg %p156
        $region34: #{tpu_custom_call.1} parent=15 // pred_check_branch
          %281 = sbr.rel (%p279) target = $region36
        $region35: #{tpu_custom_call.1} parent=15 // pred_region
          %p282 = scmp.lt.s32.totalorder %s25, 1
          %s283 = scalar_select %p282, %s25, 1
          %s284 = smul.addr %s283, 2
          %s285 = smul.addr %s284, 8
          %s286 = scalar_lea.vmem %s4, %s285
        $region36: #{tpu_custom_call.1} parent=15 // pred_fallthru
          _
        // Predicated region
        $region37: #{tpu_custom_call.1} parent=15 // pred_check
          %p287 = pneg %p182
        $region38: #{tpu_custom_call.1} parent=15 // pred_check_branch
          %289 = sbr.rel (%p287) target = $region40
        $region39: #{tpu_custom_call.1} parent=15 // pred_region
          %p290 = scmp.lt.s32.totalorder %s25, 1
          %s291 = scalar_select %p290, %s25, 1
          %s292 = smul.addr %s291, 2
          %s293 = smul.addr %s292, 8
          %s294 = scalar_lea.vmem %s5, %s293
        $region40: #{tpu_custom_call.1} parent=15 // pred_fallthru
          _
      $region16: #{tpu_custom_call.1} parent=5 // pred_fallthru
        _
      %p295 = scmp.le.s32.totalorder 1, %s18
      %p296 = scmp.lt.s32.totalorder %s18, 3
      %p297 = pnand %p295, %p296
      %p298 = pneg %p297
      // Predicated region
      $region41: #{tpu_custom_call.1} parent=5 // pred_check
        _
      $region42: #{tpu_custom_call.1} parent=5 // pred_check_branch
        %300 = sbr.rel (%p297) target = $region44
      $region43: #{tpu_custom_call.1} parent=5 // pred_region
        %s301 = ssub.s32 %s18, 1
        %s302 = sand.u32 %s45, 1
        %s303 = scalar_lea.sflag [#allocation3], %s302
        %s304 = sand.u32 %s45, 1
        %s305 = smul.addr %s304, 64
        %s306 = scalar_lea.vmem [#allocation2], %s305
        // Predicated region
        $region45: #{tpu_custom_call.1} parent=43 // pred_check
          %p307 = pneg %p58
        $region46: #{tpu_custom_call.1} parent=43 // pred_check_branch
          %309 = sbr.rel (%p307) target = $region48
        $region47: #{tpu_custom_call.1} parent=43 // pred_region
          %310 = dma.done %s303, 1024
        $region48: #{tpu_custom_call.1} parent=43 // pred_fallthru
          _
        %s311 = sand.u32 %s45, 1
        %s312 = scalar_lea.sflag [#allocation3], %s311
        %s313 = sand.u32 %s45, 1
        %s314 = smul.addr %s313, 64
        %s315 = scalar_lea.vmem [#allocation2], %s314
        %p316 = pneg %p58
        %p317 = pneg %p55
        %p318 = scmp.lt.s32.totalorder %s27, 1
        %s319 = scalar_select %p318, %s27, 1
        %s320 = smul.addr %s319, 8
        %s321 = scalar_lea.vmem %s1, %s320
        %p322 = pneg %p84
        %p323 = pneg %p81
        %p324 = scmp.lt.s32.totalorder %s27, 1
        %s325 = scalar_select %p324, %s27, 1
        %s326 = smul.addr %s325, 2
        %s327 = smul.addr %s326, 8
        %s328 = scalar_lea.vmem %s2, %s327
        %p329 = pneg %p110
        %p330 = pneg %p107
        %p331 = scmp.lt.s32.totalorder %s27, 1
        %s332 = scalar_select %p331, %s27, 1
        %s333 = smul.addr %s332, 2
        %s334 = smul.addr %s333, 8
        %s335 = scalar_lea.vmem %s3, %s334
        %p336 = pneg %p136
        %p337 = pneg %p133
        %p338 = scmp.lt.s32.totalorder %s27, 1
        %s339 = scalar_select %p338, %s27, 1
        %s340 = smul.addr %s339, 2
        %s341 = smul.addr %s340, 8
        %s342 = scalar_lea.vmem %s4, %s341
        %p343 = pneg %p162
        %p344 = pneg %p159
        %p345 = scmp.lt.s32.totalorder %s27, 1
        %s346 = scalar_select %p345, %s27, 1
        %s347 = smul.addr %s346, 2
        %s348 = smul.addr %s347, 8
        %s349 = scalar_lea.vmem %s5, %s348
        %p350 = pneg %p188
        %p351 = pneg %p185
        %p352 = pneg %p216
        %p353 = pneg %p213
        %s354 = sand.u32 %s203, 1
        %s355 = scalar_lea.sflag [#allocation4], %s354
        %s356 = sand.u32 %s203, 1
        %s357 = smul.addr %s356, 16
        %s358 = scalar_lea.vmem [#allocation5], %s357
        %p359 = scmp.lt.s32.totalorder %s27, 1
        %s360 = scalar_select %p359, %s27, 1
        %s361 = smul.addr %s360, 8
        %s362 = scalar_lea.vmem %s1, %s361
        %p363 = scmp.lt.s32.totalorder %s27, 1
        %s364 = scalar_select %p363, %s27, 1
        %s365 = smul.addr %s364, 2
        %s366 = smul.addr %s365, 8
        %s367 = scalar_lea.vmem %s2, %s366
        %p368 = scmp.lt.s32.totalorder %s27, 1
        %s369 = scalar_select %p368, %s27, 1
        %s370 = smul.addr %s369, 2
        %s371 = smul.addr %s370, 8
        %s372 = scalar_lea.vmem %s3, %s371
        %p373 = scmp.lt.s32.totalorder %s27, 1
        %s374 = scalar_select %p373, %s27, 1
        %s375 = smul.addr %s374, 2
        %s376 = smul.addr %s375, 8
        %s377 = scalar_lea.vmem %s4, %s376
        %p378 = scmp.lt.s32.totalorder %s27, 1
        %s379 = scalar_select %p378, %s27, 1
        %s380 = smul.addr %s379, 2
        %s381 = smul.addr %s380, 8
        %s382 = scalar_lea.vmem %s5, %s381
        %v383 = vld [vmem:[%s306] sm:$0xff]
        %v384 = vld [vmem:[%s306 + $0x8] sm:$0xff]
        %v385 = vld [vmem:[%s306 + $0x10] sm:$0xff]
        %v386 = vld [vmem:[%s306 + $0x18] sm:$0xff]
        %v387 = vld [vmem:[%s306 + $0x20] sm:$0xff]
        %v388 = vld [vmem:[%s306 + $0x28] sm:$0xff]
        %v389 = vld [vmem:[%s306 + $0x30] sm:$0xff]
        %v390 = vld [vmem:[%s306 + $0x38] sm:$0xff]
        %v391 = vld [vmem:[%s362] sm:$0xff]
        %vm392 = vcmask 64512
        %v394 = vsel %vm392, %v391, 0
        %396 = vmatprep.subr.mxu0 %v384
        %397 = vmatpush1.msra.mxu0 %v383
        %398 = vmatprep.subr.mxu0 0.0
        %399 = vmatpush1.msra.mxu0 0.0
        %400 = vmatprep.subr.mxu0 0.0
        %401 = vmatpush1.msra.mxu0 0.0
        %402 = vmatprep.subr.mxu0 0.0
        %403 = vmatpush1.msra.mxu0 0.0
        %404 = vmatprep.subr.mxu0 0.0
        %405 = vmatpush1.msra.mxu0 0.0
        %406 = vmatprep.subr.mxu0 0.0
        %407 = vmatpush1.msra.mxu0 0.0
        %408 = vmatprep.subr.mxu0 0.0
        %409 = vmatpush1.msra.mxu0 0.0
        %410 = vmatprep.subr.mxu0 0.0
        %411 = vmatpush1.msra.mxu0 0.0
        %412 = vmatprep.subr.mxu0 0.0
        %413 = vmatpush1.msra.mxu0 0.0
        %414 = vmatprep.subr.mxu0 0.0
        %415 = vmatpush1.msra.mxu0 0.0
        %416 = vmatprep.subr.mxu0 0.0
        %417 = vmatpush1.msra.mxu0 0.0
        %418 = vmatprep.subr.mxu0 0.0
        %419 = vmatpush1.msra.mxu0 0.0
        %420 = vmatprep.subr.mxu0 0.0
        %421 = vmatpush1.msra.mxu0 0.0
        %422 = vmatprep.subr.mxu0 0.0
        %423 = vmatpush1.msra.mxu0 0.0
        %424 = vmatprep.subr.mxu0 0.0
        %425 = vmatpush1.msra.mxu0 0.0
        %426 = vmatprep.subr.mxu0 0.0
        %427 = vmatpush1.msra.mxu0 0.0
        %428 = vmatprep.subr.mxu0 0.0
        %429 = vmatpush1.msra.mxu0 0.0
        %430 = vmatprep.subr.mxu0 0.0
        %431 = vmatpush1.msra.mxu0 0.0
        %432 = vmatprep.subr.mxu0 0.0
        %433 = vmatpush1.msra.mxu0 0.0
        %434 = vmatprep.subr.mxu0 0.0
        %435 = vmatpush1.msra.mxu0 0.0
        %436 = vmatprep.subr.mxu0 0.0
        %437 = vmatpush1.msra.mxu0 0.0
        %438 = vmatprep.subr.mxu0 0.0
        %439 = vmatpush1.msra.mxu0 0.0
        %440 = vmatprep.subr.mxu0 0.0
        %441 = vmatpush1.msra.mxu0 0.0
        %442 = vmatprep.subr.mxu0 0.0
        %443 = vmatpush1.msra.mxu0 0.0
        %444 = vmatprep.subr.mxu0 0.0
        %445 = vmatpush1.msra.mxu0 0.0
        %446 = vmatprep.subr.mxu0 0.0
        %447 = vmatpush1.msra.mxu0 0.0
        %448 = vmatprep.subr.mxu0 0.0
        %449 = vmatpush1.msra.mxu0 0.0
        %450 = vmatprep.subr.mxu0 0.0
        %451 = vmatpush1.msra.mxu0 0.0
        %452 = vmatprep.subr.mxu0 0.0
        %453 = vmatpush1.msra.mxu0 0.0
        %454 = vmatprep.subr.mxu0 0.0
        %455 = vmatpush1.msra.mxu0 0.0
        %456 = vmatprep.subr.mxu0 0.0
        %457 = vmatpush1.msra.mxu0 0.0
        %458 = vmatprep.subr.mxu0 0.0
        %459 = vmatpush1.msra.mxu0 0.0
        %460 = vmatprep.mubr.f32.mxu0 0.0
        %461 = vmatmul.mubr.f32.gmra.mrb[0].mxu0 %v394
        %v462 = vpop.f32.mrb[0].mxu0
        %v463 = vadd.f32 0.0, %v462
        %v464 = vpop.f32.mrb[0].mxu0
        %v465 = vadd.f32 0.0, %v464
        %466 = vdwg.mxu0
        %467 = vmatprep.subr.mxu0 %v386
        %468 = vmatpush1.msra.mxu0 %v385
        %469 = vmatprep.subr.mxu0 0.0
        %470 = vmatpush1.msra.mxu0 0.0
        %471 = vmatprep.subr.mxu0 0.0
        %472 = vmatpush1.msra.mxu0 0.0
        %473 = vmatprep.subr.mxu0 0.0
        %474 = vmatpush1.msra.mxu0 0.0
        %475 = vmatprep.subr.mxu0 0.0
        %476 = vmatpush1.msra.mxu0 0.0
        %477 = vmatprep.subr.mxu0 0.0
        %478 = vmatpush1.msra.mxu0 0.0
        %479 = vmatprep.subr.mxu0 0.0
        %480 = vmatpush1.msra.mxu0 0.0
        %481 = vmatprep.subr.mxu0 0.0
        %482 = vmatpush1.msra.mxu0 0.0
        %483 = vmatprep.subr.mxu0 0.0
        %484 = vmatpush1.msra.mxu0 0.0
        %485 = vmatprep.subr.mxu0 0.0
        %486 = vmatpush1.msra.mxu0 0.0
        %487 = vmatprep.subr.mxu0 0.0
        %488 = vmatpush1.msra.mxu0 0.0
        %489 = vmatprep.subr.mxu0 0.0
        %490 = vmatpush1.msra.mxu0 0.0
        %491 = vmatprep.subr.mxu0 0.0
        %492 = vmatpush1.msra.mxu0 0.0
        %493 = vmatprep.subr.mxu0 0.0
        %494 = vmatpush1.msra.mxu0 0.0
        %495 = vmatprep.subr.mxu0 0.0
        %496 = vmatpush1.msra.mxu0 0.0
        %497 = vmatprep.subr.mxu0 0.0
        %498 = vmatpush1.msra.mxu0 0.0
        %499 = vmatprep.subr.mxu0 0.0
        %500 = vmatpush1.msra.mxu0 0.0
        %501 = vmatprep.subr.mxu0 0.0
        %502 = vmatpush1.msra.mxu0 0.0
        %503 = vmatprep.subr.mxu0 0.0
        %504 = vmatpush1.msra.mxu0 0.0
        %505 = vmatprep.subr.mxu0 0.0
        %506 = vmatpush1.msra.mxu0 0.0
        %507 = vmatprep.subr.mxu0 0.0
        %508 = vmatpush1.msra.mxu0 0.0
        %509 = vmatprep.subr.mxu0 0.0
        %510 = vmatpush1.msra.mxu0 0.0
        %511 = vmatprep.subr.mxu0 0.0
        %512 = vmatpush1.msra.mxu0 0.0
        %513 = vmatprep.subr.mxu0 0.0
        %514 = vmatpush1.msra.mxu0 0.0
        %515 = vmatprep.subr.mxu0 0.0
        %516 = vmatpush1.msra.mxu0 0.0
        %517 = vmatprep.subr.mxu0 0.0
        %518 = vmatpush1.msra.mxu0 0.0
        %519 = vmatprep.subr.mxu0 0.0
        %520 = vmatpush1.msra.mxu0 0.0
        %521 = vmatprep.subr.mxu0 0.0
        %522 = vmatpush1.msra.mxu0 0.0
        %523 = vmatprep.subr.mxu0 0.0
        %524 = vmatpush1.msra.mxu0 0.0
        %525 = vmatprep.subr.mxu0 0.0
        %526 = vmatpush1.msra.mxu0 0.0
        %527 = vmatprep.subr.mxu0 0.0
        %528 = vmatpush1.msra.mxu0 0.0
        %529 = vmatprep.subr.mxu0 0.0
        %530 = vmatpush1.msra.mxu0 0.0
        %531 = vmatprep.mubr.f32.mxu0 0.0
        %532 = vmatmul.mubr.f32.gmra.mrb[0].mxu0 %v394
        %v533 = vpop.f32.mrb[0].mxu0
        %v534 = vadd.f32 0.0, %v533
        %v535 = vpop.f32.mrb[0].mxu0
        %v536 = vadd.f32 0.0, %v535
        %537 = vdwg.mxu0
        %538 = vmatprep.subr.mxu0 %v388
        %539 = vmatpush1.msra.mxu0 %v387
        %540 = vmatprep.subr.mxu0 0.0
        %541 = vmatpush1.msra.mxu0 0.0
        %542 = vmatprep.subr.mxu0 0.0
        %543 = vmatpush1.msra.mxu0 0.0
        %544 = vmatprep.subr.mxu0 0.0
        %545 = vmatpush1.msra.mxu0 0.0
        %546 = vmatprep.subr.mxu0 0.0
        %547 = vmatpush1.msra.mxu0 0.0
        %548 = vmatprep.subr.mxu0 0.0
        %549 = vmatpush1.msra.mxu0 0.0
        %550 = vmatprep.subr.mxu0 0.0
        %551 = vmatpush1.msra.mxu0 0.0
        %552 = vmatprep.subr.mxu0 0.0
        %553 = vmatpush1.msra.mxu0 0.0
        %554 = vmatprep.subr.mxu0 0.0
        %555 = vmatpush1.msra.mxu0 0.0
        %556 = vmatprep.subr.mxu0 0.0
        %557 = vmatpush1.msra.mxu0 0.0
        %558 = vmatprep.subr.mxu0 0.0
        %559 = vmatpush1.msra.mxu0 0.0
        %560 = vmatprep.subr.mxu0 0.0
        %561 = vmatpush1.msra.mxu0 0.0
        %562 = vmatprep.subr.mxu0 0.0
        %563 = vmatpush1.msra.mxu0 0.0
        %564 = vmatprep.subr.mxu0 0.0
        %565 = vmatpush1.msra.mxu0 0.0
        %566 = vmatprep.subr.mxu0 0.0
        %567 = vmatpush1.msra.mxu0 0.0
        %568 = vmatprep.subr.mxu0 0.0
        %569 = vmatpush1.msra.mxu0 0.0
        %570 = vmatprep.subr.mxu0 0.0
        %571 = vmatpush1.msra.mxu0 0.0
        %572 = vmatprep.subr.mxu0 0.0
        %573 = vmatpush1.msra.mxu0 0.0
        %574 = vmatprep.subr.mxu0 0.0
        %575 = vmatpush1.msra.mxu0 0.0
        %576 = vmatprep.subr.mxu0 0.0
        %577 = vmatpush1.msra.mxu0 0.0
        %578 = vmatprep.subr.mxu0 0.0
        %579 = vmatpush1.msra.mxu0 0.0
        %580 = vmatprep.subr.mxu0 0.0
        %581 = vmatpush1.msra.mxu0 0.0
        %582 = vmatprep.subr.mxu0 0.0
        %583 = vmatpush1.msra.mxu0 0.0
        %584 = vmatprep.subr.mxu0 0.0
        %585 = vmatpush1.msra.mxu0 0.0
        %586 = vmatprep.subr.mxu0 0.0
        %587 = vmatpush1.msra.mxu0 0.0
        %588 = vmatprep.subr.mxu0 0.0
        %589 = vmatpush1.msra.mxu0 0.0
        %590 = vmatprep.subr.mxu0 0.0
        %591 = vmatpush1.msra.mxu0 0.0
        %592 = vmatprep.subr.mxu0 0.0
        %593 = vmatpush1.msra.mxu0 0.0
        %594 = vmatprep.subr.mxu0 0.0
        %595 = vmatpush1.msra.mxu0 0.0
        %596 = vmatprep.subr.mxu0 0.0
        %597 = vmatpush1.msra.mxu0 0.0
        %598 = vmatprep.subr.mxu0 0.0
        %599 = vmatpush1.msra.mxu0 0.0
        %600 = vmatprep.subr.mxu0 0.0
        %601 = vmatpush1.msra.mxu0 0.0
        %602 = vmatprep.mubr.f32.mxu0 0.0
        %603 = vmatmul.mubr.f32.gmra.mrb[0].mxu0 %v394
        %v604 = vpop.f32.mrb[0].mxu0
        %v605 = vadd.f32 0.0, %v604
        %v606 = vpop.f32.mrb[0].mxu0
        %v607 = vadd.f32 0.0, %v606
        %608 = vdwg.mxu0
        %609 = vmatprep.subr.mxu0 %v390
        %610 = vmatpush1.msra.mxu0 %v389
        %611 = vmatprep.subr.mxu0 0.0
        %612 = vmatpush1.msra.mxu0 0.0
        %613 = vmatprep.subr.mxu0 0.0
        %614 = vmatpush1.msra.mxu0 0.0
        %615 = vmatprep.subr.mxu0 0.0
        %616 = vmatpush1.msra.mxu0 0.0
        %617 = vmatprep.subr.mxu0 0.0
        %618 = vmatpush1.msra.mxu0 0.0
        %619 = vmatprep.subr.mxu0 0.0
        %620 = vmatpush1.msra.mxu0 0.0
        %621 = vmatprep.subr.mxu0 0.0
        %622 = vmatpush1.msra.mxu0 0.0
        %623 = vmatprep.subr.mxu0 0.0
        %624 = vmatpush1.msra.mxu0 0.0
        %625 = vmatprep.subr.mxu0 0.0
        %626 = vmatpush1.msra.mxu0 0.0
        %627 = vmatprep.subr.mxu0 0.0
        %628 = vmatpush1.msra.mxu0 0.0
        %629 = vmatprep.subr.mxu0 0.0
        %630 = vmatpush1.msra.mxu0 0.0
        %631 = vmatprep.subr.mxu0 0.0
        %632 = vmatpush1.msra.mxu0 0.0
        %633 = vmatprep.subr.mxu0 0.0
        %634 = vmatpush1.msra.mxu0 0.0
        %635 = vmatprep.subr.mxu0 0.0
        %636 = vmatpush1.msra.mxu0 0.0
        %637 = vmatprep.subr.mxu0 0.0
        %638 = vmatpush1.msra.mxu0 0.0
        %639 = vmatprep.subr.mxu0 0.0
        %640 = vmatpush1.msra.mxu0 0.0
        %641 = vmatprep.subr.mxu0 0.0
        %642 = vmatpush1.msra.mxu0 0.0
        %643 = vmatprep.subr.mxu0 0.0
        %644 = vmatpush1.msra.mxu0 0.0
        %645 = vmatprep.subr.mxu0 0.0
        %646 = vmatpush1.msra.mxu0 0.0
        %647 = vmatprep.subr.mxu0 0.0
        %648 = vmatpush1.msra.mxu0 0.0
        %649 = vmatprep.subr.mxu0 0.0
        %650 = vmatpush1.msra.mxu0 0.0
        %651 = vmatprep.subr.mxu0 0.0
        %652 = vmatpush1.msra.mxu0 0.0
        %653 = vmatprep.subr.mxu0 0.0
        %654 = vmatpush1.msra.mxu0 0.0
        %655 = vmatprep.subr.mxu0 0.0
        %656 = vmatpush1.msra.mxu0 0.0
        %657 = vmatprep.subr.mxu0 0.0
        %658 = vmatpush1.msra.mxu0 0.0
        %659 = vmatprep.subr.mxu0 0.0
        %660 = vmatpush1.msra.mxu0 0.0
        %661 = vmatprep.subr.mxu0 0.0
        %662 = vmatpush1.msra.mxu0 0.0
        %663 = vmatprep.subr.mxu0 0.0
        %664 = vmatpush1.msra.mxu0 0.0
        %665 = vmatprep.subr.mxu0 0.0
        %666 = vmatpush1.msra.mxu0 0.0
        %667 = vmatprep.subr.mxu0 0.0
        %668 = vmatpush1.msra.mxu0 0.0
        %669 = vmatprep.subr.mxu0 0.0
        %670 = vmatpush1.msra.mxu0 0.0
        %671 = vmatprep.subr.mxu0 0.0
        %672 = vmatpush1.msra.mxu0 0.0
        %673 = vmatprep.mubr.f32.mxu0 0.0
        %674 = vmatmul.mubr.f32.gmra.mrb[0].mxu0 %v394
        %v675 = vpop.f32.mrb[0].mxu0
        %v676 = vadd.f32 0.0, %v675
        %v677 = vpop.f32.mrb[0].mxu0
        %v678 = vadd.f32 0.0, %v677
        %679 = vdwg.mxu0
        %v680 = vmax.f32 %v463, 0.0
        %v681 = vmax.f32 %v465, 0.0
        %v682 = vmax.f32 %v534, 0.0
        %v683 = vmax.f32 %v536, 0.0
        %v684 = vmax.f32 %v605, 0.0
        %v685 = vmax.f32 %v607, 0.0
        %v686 = vmax.f32 %v676, 0.0
        %v687 = vmax.f32 %v678, 0.0
        %v688 = vld [vmem:[%s367] sm:$0xff]
        %v689 = vld [vmem:[%s367 + $0x8] sm:$0xff]
        %v690 = vld [vmem:[%s372] sm:$0xff]
        %v691 = vld [vmem:[%s372 + $0x8] sm:$0xff]
        %693 = vset.pattern.permute.xlu0 0
        %694 = vperm.xlu0 %693, %v690
        %v695 = vpop.permute.xlu0 %694
        %698 = vset.pattern.permute.xlu0 0
        %699 = vperm.xlu0 %698, %v691
        %v700 = vpop.permute.xlu0 %699
        %v703 = vsel %vm392, %v688, 0
        %v706 = vsel %vm392, %v689, 0
        %708 = vmatprep.subr.mxu0 %v681
        %709 = vmatpush1.msra.mxu0 %v680
        %710 = vmatprep.subr.mxu0 0.0
        %711 = vmatpush1.msra.mxu0 0.0
        %712 = vmatprep.subr.mxu0 0.0
        %713 = vmatpush1.msra.mxu0 0.0
        %714 = vmatprep.subr.mxu0 0.0
        %715 = vmatpush1.msra.mxu0 0.0
        %716 = vmatprep.subr.mxu0 0.0
        %717 = vmatpush1.msra.mxu0 0.0
        %718 = vmatprep.subr.mxu0 0.0
        %719 = vmatpush1.msra.mxu0 0.0
        %720 = vmatprep.subr.mxu0 0.0
        %721 = vmatpush1.msra.mxu0 0.0
        %722 = vmatprep.subr.mxu0 0.0
        %723 = vmatpush1.msra.mxu0 0.0
        %724 = vmatprep.subr.mxu0 0.0
        %725 = vmatpush1.msra.mxu0 0.0
        %726 = vmatprep.subr.mxu0 0.0
        %727 = vmatpush1.msra.mxu0 0.0
        %728 = vmatprep.subr.mxu0 0.0
        %729 = vmatpush1.msra.mxu0 0.0
        %730 = vmatprep.subr.mxu0 0.0
        %731 = vmatpush1.msra.mxu0 0.0
        %732 = vmatprep.subr.mxu0 0.0
        %733 = vmatpush1.msra.mxu0 0.0
        %734 = vmatprep.subr.mxu0 0.0
        %735 = vmatpush1.msra.mxu0 0.0
        %736 = vmatprep.subr.mxu0 0.0
        %737 = vmatpush1.msra.mxu0 0.0
        %738 = vmatprep.subr.mxu0 0.0
        %739 = vmatpush1.msra.mxu0 0.0
        %740 = vmatprep.subr.mxu0 0.0
        %741 = vmatpush1.msra.mxu0 0.0
        %742 = vmatprep.subr.mxu0 0.0
        %743 = vmatpush1.msra.mxu0 0.0
        %744 = vmatprep.subr.mxu0 0.0
        %745 = vmatpush1.msra.mxu0 0.0
        %746 = vmatprep.subr.mxu0 0.0
        %747 = vmatpush1.msra.mxu0 0.0
        %748 = vmatprep.subr.mxu0 0.0
        %749 = vmatpush1.msra.mxu0 0.0
        %750 = vmatprep.subr.mxu0 0.0
        %751 = vmatpush1.msra.mxu0 0.0
        %752 = vmatprep.subr.mxu0 0.0
        %753 = vmatpush1.msra.mxu0 0.0
        %754 = vmatprep.subr.mxu0 0.0
        %755 = vmatpush1.msra.mxu0 0.0
        %756 = vmatprep.subr.mxu0 0.0
        %757 = vmatpush1.msra.mxu0 0.0
        %758 = vmatprep.subr.mxu0 0.0
        %759 = vmatpush1.msra.mxu0 0.0
        %760 = vmatprep.subr.mxu0 0.0
        %761 = vmatpush1.msra.mxu0 0.0
        %762 = vmatprep.subr.mxu0 0.0
        %763 = vmatpush1.msra.mxu0 0.0
        %764 = vmatprep.subr.mxu0 0.0
        %765 = vmatpush1.msra.mxu0 0.0
        %766 = vmatprep.subr.mxu0 0.0
        %767 = vmatpush1.msra.mxu0 0.0
        %768 = vmatprep.subr.mxu0 0.0
        %769 = vmatpush1.msra.mxu0 0.0
        %770 = vmatprep.subr.mxu0 0.0
        %771 = vmatpush1.msra.mxu0 0.0
        %772 = vmatprep.mubr.f32.mxu0 0.0
        %773 = vmatmul.mubr.f32.gmra.mrb[0].mxu0 %v703
        %v774 = vpop.f32.mrb[0].mxu0
        %v775 = vadd.f32 %v695, %v774
        %v776 = vpop.f32.mrb[0].mxu0
        %v777 = vadd.f32 %v695, %v776
        %778 = vmatprep.mubr.f32.mxu0 0.0
        %779 = vmatmul.mubr.f32.gmra.mrb[0].mxu0 %v706
        %v780 = vpop.f32.mrb[0].mxu0
        %v781 = vadd.f32 %v700, %v780
        %v782 = vpop.f32.mrb[0].mxu0
        %v783 = vadd.f32 %v700, %v782
        %784 = vdwg.mxu0
        %785 = vmatprep.subr.mxu0 %v683
        %786 = vmatpush1.msra.mxu0 %v682
        %787 = vmatprep.subr.mxu0 0.0
        %788 = vmatpush1.msra.mxu0 0.0
        %789 = vmatprep.subr.mxu0 0.0
        %790 = vmatpush1.msra.mxu0 0.0
        %791 = vmatprep.subr.mxu0 0.0
        %792 = vmatpush1.msra.mxu0 0.0
        %793 = vmatprep.subr.mxu0 0.0
        %794 = vmatpush1.msra.mxu0 0.0
        %795 = vmatprep.subr.mxu0 0.0
        %796 = vmatpush1.msra.mxu0 0.0
        %797 = vmatprep.subr.mxu0 0.0
        %798 = vmatpush1.msra.mxu0 0.0
        %799 = vmatprep.subr.mxu0 0.0
        %800 = vmatpush1.msra.mxu0 0.0
        %801 = vmatprep.subr.mxu0 0.0
        %802 = vmatpush1.msra.mxu0 0.0
        %803 = vmatprep.subr.mxu0 0.0
        %804 = vmatpush1.msra.mxu0 0.0
        %805 = vmatprep.subr.mxu0 0.0
        %806 = vmatpush1.msra.mxu0 0.0
        %807 = vmatprep.subr.mxu0 0.0
        %808 = vmatpush1.msra.mxu0 0.0
        %809 = vmatprep.subr.mxu0 0.0
        %810 = vmatpush1.msra.mxu0 0.0
        %811 = vmatprep.subr.mxu0 0.0
        %812 = vmatpush1.msra.mxu0 0.0
        %813 = vmatprep.subr.mxu0 0.0
        %814 = vmatpush1.msra.mxu0 0.0
        %815 = vmatprep.subr.mxu0 0.0
        %816 = vmatpush1.msra.mxu0 0.0
        %817 = vmatprep.subr.mxu0 0.0
        %818 = vmatpush1.msra.mxu0 0.0
        %819 = vmatprep.subr.mxu0 0.0
        %820 = vmatpush1.msra.mxu0 0.0
        %821 = vmatprep.subr.mxu0 0.0
        %822 = vmatpush1.msra.mxu0 0.0
        %823 = vmatprep.subr.mxu0 0.0
        %824 = vmatpush1.msra.mxu0 0.0
        %825 = vmatprep.subr.mxu0 0.0
        %826 = vmatpush1.msra.mxu0 0.0
        %827 = vmatprep.subr.mxu0 0.0
        %828 = vmatpush1.msra.mxu0 0.0
        %829 = vmatprep.subr.mxu0 0.0
        %830 = vmatpush1.msra.mxu0 0.0
        %831 = vmatprep.subr.mxu0 0.0
        %832 = vmatpush1.msra.mxu0 0.0
        %833 = vmatprep.subr.mxu0 0.0
        %834 = vmatpush1.msra.mxu0 0.0
        %835 = vmatprep.subr.mxu0 0.0
        %836 = vmatpush1.msra.mxu0 0.0
        %837 = vmatprep.subr.mxu0 0.0
        %838 = vmatpush1.msra.mxu0 0.0
        %839 = vmatprep.subr.mxu0 0.0
        %840 = vmatpush1.msra.mxu0 0.0
        %841 = vmatprep.subr.mxu0 0.0
        %842 = vmatpush1.msra.mxu0 0.0
        %843 = vmatprep.subr.mxu0 0.0
        %844 = vmatpush1.msra.mxu0 0.0
        %845 = vmatprep.subr.mxu0 0.0
        %846 = vmatpush1.msra.mxu0 0.0
        %847 = vmatprep.subr.mxu0 0.0
        %848 = vmatpush1.msra.mxu0 0.0
        %849 = vmatprep.mubr.f32.mxu0 0.0
        %850 = vmatmul.mubr.f32.gmra.mrb[0].mxu0 %v703
        %v851 = vpop.f32.mrb[0].mxu0
        %v852 = vadd.f32 %v695, %v851
        %v853 = vpop.f32.mrb[0].mxu0
        %v854 = vadd.f32 %v695, %v853
        %855 = vmatprep.mubr.f32.mxu0 0.0
        %856 = vmatmul.mubr.f32.gmra.mrb[0].mxu0 %v706
        %v857 = vpop.f32.mrb[0].mxu0
        %v858 = vadd.f32 %v700, %v857
        %v859 = vpop.f32.mrb[0].mxu0
        %v860 = vadd.f32 %v700, %v859
        %861 = vdwg.mxu0
        %862 = vmatprep.subr.mxu0 %v685
        %863 = vmatpush1.msra.mxu0 %v684
        %864 = vmatprep.subr.mxu0 0.0
        %865 = vmatpush1.msra.mxu0 0.0
        %866 = vmatprep.subr.mxu0 0.0
        %867 = vmatpush1.msra.mxu0 0.0
        %868 = vmatprep.subr.mxu0 0.0
        %869 = vmatpush1.msra.mxu0 0.0
        %870 = vmatprep.subr.mxu0 0.0
        %871 = vmatpush1.msra.mxu0 0.0
        %872 = vmatprep.subr.mxu0 0.0
        %873 = vmatpush1.msra.mxu0 0.0
        %874 = vmatprep.subr.mxu0 0.0
        %875 = vmatpush1.msra.mxu0 0.0
        %876 = vmatprep.subr.mxu0 0.0
        %877 = vmatpush1.msra.mxu0 0.0
        %878 = vmatprep.subr.mxu0 0.0
        %879 = vmatpush1.msra.mxu0 0.0
        %880 = vmatprep.subr.mxu0 0.0
        %881 = vmatpush1.msra.mxu0 0.0
        %882 = vmatprep.subr.mxu0 0.0
        %883 = vmatpush1.msra.mxu0 0.0
        %884 = vmatprep.subr.mxu0 0.0
        %885 = vmatpush1.msra.mxu0 0.0
        %886 = vmatprep.subr.mxu0 0.0
        %887 = vmatpush1.msra.mxu0 0.0
        %888 = vmatprep.subr.mxu0 0.0
        %889 = vmatpush1.msra.mxu0 0.0
        %890 = vmatprep.subr.mxu0 0.0
        %891 = vmatpush1.msra.mxu0 0.0
        %892 = vmatprep.subr.mxu0 0.0
        %893 = vmatpush1.msra.mxu0 0.0
        %894 = vmatprep.subr.mxu0 0.0
        %895 = vmatpush1.msra.mxu0 0.0
        %896 = vmatprep.subr.mxu0 0.0
        %897 = vmatpush1.msra.mxu0 0.0
        %898 = vmatprep.subr.mxu0 0.0
        %899 = vmatpush1.msra.mxu0 0.0
        %900 = vmatprep.subr.mxu0 0.0
        %901 = vmatpush1.msra.mxu0 0.0
        %902 = vmatprep.subr.mxu0 0.0
        %903 = vmatpush1.msra.mxu0 0.0
        %904 = vmatprep.subr.mxu0 0.0
        %905 = vmatpush1.msra.mxu0 0.0
        %906 = vmatprep.subr.mxu0 0.0
        %907 = vmatpush1.msra.mxu0 0.0
        %908 = vmatprep.subr.mxu0 0.0
        %909 = vmatpush1.msra.mxu0 0.0
        %910 = vmatprep.subr.mxu0 0.0
        %911 = vmatpush1.msra.mxu0 0.0
        %912 = vmatprep.subr.mxu0 0.0
        %913 = vmatpush1.msra.mxu0 0.0
        %914 = vmatprep.subr.mxu0 0.0
        %915 = vmatpush1.msra.mxu0 0.0
        %916 = vmatprep.subr.mxu0 0.0
        %917 = vmatpush1.msra.mxu0 0.0
        %918 = vmatprep.subr.mxu0 0.0
        %919 = vmatpush1.msra.mxu0 0.0
        %920 = vmatprep.subr.mxu0 0.0
        %921 = vmatpush1.msra.mxu0 0.0
        %922 = vmatprep.subr.mxu0 0.0
        %923 = vmatpush1.msra.mxu0 0.0
        %924 = vmatprep.subr.mxu0 0.0
        %925 = vmatpush1.msra.mxu0 0.0
        %926 = vmatprep.mubr.f32.mxu0 0.0
        %927 = vmatmul.mubr.f32.gmra.mrb[0].mxu0 %v703
        %v928 = vpop.f32.mrb[0].mxu0
        %v929 = vadd.f32 %v695, %v928
        %v930 = vpop.f32.mrb[0].mxu0
        %v931 = vadd.f32 %v695, %v930
        %932 = vmatprep.mubr.f32.mxu0 0.0
        %933 = vmatmul.mubr.f32.gmra.mrb[0].mxu0 %v706
        %v934 = vpop.f32.mrb[0].mxu0
        %v935 = vadd.f32 %v700, %v934
        %v936 = vpop.f32.mrb[0].mxu0
        %v937 = vadd.f32 %v700, %v936
        %938 = vdwg.mxu0
        %939 = vmatprep.subr.mxu0 %v687
        %940 = vmatpush1.msra.mxu0 %v686
        %941 = vmatprep.subr.mxu0 0.0
        %942 = vmatpush1.msra.mxu0 0.0
        %943 = vmatprep.subr.mxu0 0.0
        %944 = vmatpush1.msra.mxu0 0.0
        %945 = vmatprep.subr.mxu0 0.0
        %946 = vmatpush1.msra.mxu0 0.0
        %947 = vmatprep.subr.mxu0 0.0
        %948 = vmatpush1.msra.mxu0 0.0
        %949 = vmatprep.subr.mxu0 0.0
        %950 = vmatpush1.msra.mxu0 0.0
        %951 = vmatprep.subr.mxu0 0.0
        %952 = vmatpush1.msra.mxu0 0.0
        %953 = vmatprep.subr.mxu0 0.0
        %954 = vmatpush1.msra.mxu0 0.0
        %955 = vmatprep.subr.mxu0 0.0
        %956 = vmatpush1.msra.mxu0 0.0
        %957 = vmatprep.subr.mxu0 0.0
        %958 = vmatpush1.msra.mxu0 0.0
        %959 = vmatprep.subr.mxu0 0.0
        %960 = vmatpush1.msra.mxu0 0.0
        %961 = vmatprep.subr.mxu0 0.0
        %962 = vmatpush1.msra.mxu0 0.0
        %963 = vmatprep.subr.mxu0 0.0
        %964 = vmatpush1.msra.mxu0 0.0
        %965 = vmatprep.subr.mxu0 0.0
        %966 = vmatpush1.msra.mxu0 0.0
        %967 = vmatprep.subr.mxu0 0.0
        %968 = vmatpush1.msra.mxu0 0.0
        %969 = vmatprep.subr.mxu0 0.0
        %970 = vmatpush1.msra.mxu0 0.0
        %971 = vmatprep.subr.mxu0 0.0
        %972 = vmatpush1.msra.mxu0 0.0
        %973 = vmatprep.subr.mxu0 0.0
        %974 = vmatpush1.msra.mxu0 0.0
        %975 = vmatprep.subr.mxu0 0.0
        %976 = vmatpush1.msra.mxu0 0.0
        %977 = vmatprep.subr.mxu0 0.0
        %978 = vmatpush1.msra.mxu0 0.0
        %979 = vmatprep.subr.mxu0 0.0
        %980 = vmatpush1.msra.mxu0 0.0
        %981 = vmatprep.subr.mxu0 0.0
        %982 = vmatpush1.msra.mxu0 0.0
        %983 = vmatprep.subr.mxu0 0.0
        %984 = vmatpush1.msra.mxu0 0.0
        %985 = vmatprep.subr.mxu0 0.0
        %986 = vmatpush1.msra.mxu0 0.0
        %987 = vmatprep.subr.mxu0 0.0
        %988 = vmatpush1.msra.mxu0 0.0
        %989 = vmatprep.subr.mxu0 0.0
        %990 = vmatpush1.msra.mxu0 0.0
        %991 = vmatprep.subr.mxu0 0.0
        %992 = vmatpush1.msra.mxu0 0.0
        %993 = vmatprep.subr.mxu0 0.0
        %994 = vmatpush1.msra.mxu0 0.0
        %995 = vmatprep.subr.mxu0 0.0
        %996 = vmatpush1.msra.mxu0 0.0
        %997 = vmatprep.subr.mxu0 0.0
        %998 = vmatpush1.msra.mxu0 0.0
        %999 = vmatprep.subr.mxu0 0.0
        %1000 = vmatpush1.msra.mxu0 0.0
        %1001 = vmatprep.subr.mxu0 0.0
        %1002 = vmatpush1.msra.mxu0 0.0
        %1003 = vmatprep.mubr.f32.mxu0 0.0
        %1004 = vmatmul.mubr.f32.gmra.mrb[0].mxu0 %v703
        %v1005 = vpop.f32.mrb[0].mxu0
        %v1006 = vadd.f32 %v695, %v1005
        %v1007 = vpop.f32.mrb[0].mxu0
        %v1008 = vadd.f32 %v695, %v1007
        %1009 = vmatprep.mubr.f32.mxu0 0.0
        %1010 = vmatmul.mubr.f32.gmra.mrb[0].mxu0 %v706
        %v1011 = vpop.f32.mrb[0].mxu0
        %v1012 = vadd.f32 %v700, %v1011
        %v1013 = vpop.f32.mrb[0].mxu0
        %v1014 = vadd.f32 %v700, %v1013
        %1015 = vdwg.mxu0
        %v1016 = vmax.f32 %v775, 0.0
        %v1017 = vmax.f32 %v777, 0.0
        %v1018 = vmax.f32 %v852, 0.0
        %v1019 = vmax.f32 %v854, 0.0
        %v1020 = vmax.f32 %v929, 0.0
        %v1021 = vmax.f32 %v931, 0.0
        %v1022 = vmax.f32 %v1006, 0.0
        %v1023 = vmax.f32 %v1008, 0.0
        %v1024 = vmax.f32 %v781, 0.0
        %v1025 = vmax.f32 %v783, 0.0
        %v1026 = vmax.f32 %v858, 0.0
        %v1027 = vmax.f32 %v860, 0.0
        %v1028 = vmax.f32 %v935, 0.0
        %v1029 = vmax.f32 %v937, 0.0
        %v1030 = vmax.f32 %v1012, 0.0
        %v1031 = vmax.f32 %v1014, 0.0
        %v1032 = vld [vmem:[%s377] sm:$0xff]
        %v1033 = vld [vmem:[%s377 + $0x8] sm:$0xff]
        %v1034 = vld [vmem:[%s382] sm:$0xff]
        %v1035 = vld [vmem:[%s382 + $0x8] sm:$0xff]
        %1037 = vset.pattern.permute.xlu0 0
        %1038 = vperm.xlu0 %1037, %v1034
        %v1039 = vpop.permute.xlu0 %1038
        %1042 = vset.pattern.permute.xlu0 0
        %1043 = vperm.xlu0 %1042, %v1035
        %v1044 = vpop.permute.xlu0 %1043
        %vm1046 = vcmask 130048
        %v1048 = vsel %vm1046, %v1032, 0
        %v1051 = vsel %vm1046, %v1033, 0
        %1053 = vmatprep.subr.mxu0 %v1017
        %1054 = vmatpush1.msra.mxu0 %v1016
        %1055 = vmatprep.subr.mxu0 %v1025
        %1056 = vmatpush1.msra.mxu0 %v1024
        %1057 = vmatprep.subr.mxu0 0.0
        %1058 = vmatpush1.msra.mxu0 0.0
        %1059 = vmatprep.subr.mxu0 0.0
        %1060 = vmatpush1.msra.mxu0 0.0
        %1061 = vmatprep.subr.mxu0 0.0
        %1062 = vmatpush1.msra.mxu0 0.0
        %1063 = vmatprep.subr.mxu0 0.0
        %1064 = vmatpush1.msra.mxu0 0.0
        %1065 = vmatprep.subr.mxu0 0.0
        %1066 = vmatpush1.msra.mxu0 0.0
        %1067 = vmatprep.subr.mxu0 0.0
        %1068 = vmatpush1.msra.mxu0 0.0
        %1069 = vmatprep.subr.mxu0 0.0
        %1070 = vmatpush1.msra.mxu0 0.0
        %1071 = vmatprep.subr.mxu0 0.0
        %1072 = vmatpush1.msra.mxu0 0.0
        %1073 = vmatprep.subr.mxu0 0.0
        %1074 = vmatpush1.msra.mxu0 0.0
        %1075 = vmatprep.subr.mxu0 0.0
        %1076 = vmatpush1.msra.mxu0 0.0
        %1077 = vmatprep.subr.mxu0 0.0
        %1078 = vmatpush1.msra.mxu0 0.0
        %1079 = vmatprep.subr.mxu0 0.0
        %1080 = vmatpush1.msra.mxu0 0.0
        %1081 = vmatprep.subr.mxu0 0.0
        %1082 = vmatpush1.msra.mxu0 0.0
        %1083 = vmatprep.subr.mxu0 0.0
        %1084 = vmatpush1.msra.mxu0 0.0
        %1085 = vmatprep.subr.mxu0 0.0
        %1086 = vmatpush1.msra.mxu0 0.0
        %1087 = vmatprep.subr.mxu0 0.0
        %1088 = vmatpush1.msra.mxu0 0.0
        %1089 = vmatprep.subr.mxu0 0.0
        %1090 = vmatpush1.msra.mxu0 0.0
        %1091 = vmatprep.subr.mxu0 0.0
        %1092 = vmatpush1.msra.mxu0 0.0
        %1093 = vmatprep.subr.mxu0 0.0
        %1094 = vmatpush1.msra.mxu0 0.0
        %1095 = vmatprep.subr.mxu0 0.0
        %1096 = vmatpush1.msra.mxu0 0.0
        %1097 = vmatprep.subr.mxu0 0.0
        %1098 = vmatpush1.msra.mxu0 0.0
        %1099 = vmatprep.subr.mxu0 0.0
        %1100 = vmatpush1.msra.mxu0 0.0
        %1101 = vmatprep.subr.mxu0 0.0
        %1102 = vmatpush1.msra.mxu0 0.0
        %1103 = vmatprep.subr.mxu0 0.0
        %1104 = vmatpush1.msra.mxu0 0.0
        %1105 = vmatprep.subr.mxu0 0.0
        %1106 = vmatpush1.msra.mxu0 0.0
        %1107 = vmatprep.subr.mxu0 0.0
        %1108 = vmatpush1.msra.mxu0 0.0
        %1109 = vmatprep.subr.mxu0 0.0
        %1110 = vmatpush1.msra.mxu0 0.0
        %1111 = vmatprep.subr.mxu0 0.0
        %1112 = vmatpush1.msra.mxu0 0.0
        %1113 = vmatprep.subr.mxu0 0.0
        %1114 = vmatpush1.msra.mxu0 0.0
        %1115 = vmatprep.subr.mxu0 0.0
        %1116 = vmatpush1.msra.mxu0 0.0
        %1117 = vmatprep.mubr.f32.mxu0 0.0
        %1118 = vmatmul.mubr.f32.gmra.mrb[0].mxu0 %v1048
        %v1119 = vpop.f32.mrb[0].mxu0
        %v1120 = vadd.f32 %v1039, %v1119
        %v1121 = vpop.f32.mrb[0].mxu0
        %v1122 = vadd.f32 %v1039, %v1121
        %1123 = vmatprep.mubr.f32.mxu0 0.0
        %1124 = vmatmul.mubr.f32.gmra.mrb[0].mxu0 %v1051
        %v1125 = vpop.f32.mrb[0].mxu0
        %v1126 = vadd.f32 %v1044, %v1125
        %v1127 = vpop.f32.mrb[0].mxu0
        %v1128 = vadd.f32 %v1044, %v1127
        %1129 = vdwg.mxu0
        %1130 = vmatprep.subr.mxu0 %v1019
        %1131 = vmatpush1.msra.mxu0 %v1018
        %1132 = vmatprep.subr.mxu0 %v1027
        %1133 = vmatpush1.msra.mxu0 %v1026
        %1134 = vmatprep.subr.mxu0 0.0
        %1135 = vmatpush1.msra.mxu0 0.0
        %1136 = vmatprep.subr.mxu0 0.0
        %1137 = vmatpush1.msra.mxu0 0.0
        %1138 = vmatprep.subr.mxu0 0.0
        %1139 = vmatpush1.msra.mxu0 0.0
        %1140 = vmatprep.subr.mxu0 0.0
        %1141 = vmatpush1.msra.mxu0 0.0
        %1142 = vmatprep.subr.mxu0 0.0
        %1143 = vmatpush1.msra.mxu0 0.0
        %1144 = vmatprep.subr.mxu0 0.0
        %1145 = vmatpush1.msra.mxu0 0.0
        %1146 = vmatprep.subr.mxu0 0.0
        %1147 = vmatpush1.msra.mxu0 0.0
        %1148 = vmatprep.subr.mxu0 0.0
        %1149 = vmatpush1.msra.mxu0 0.0
        %1150 = vmatprep.subr.mxu0 0.0
        %1151 = vmatpush1.msra.mxu0 0.0
        %1152 = vmatprep.subr.mxu0 0.0
        %1153 = vmatpush1.msra.mxu0 0.0
        %1154 = vmatprep.subr.mxu0 0.0
        %1155 = vmatpush1.msra.mxu0 0.0
        %1156 = vmatprep.subr.mxu0 0.0
        %1157 = vmatpush1.msra.mxu0 0.0
        %1158 = vmatprep.subr.mxu0 0.0
        %1159 = vmatpush1.msra.mxu0 0.0
        %1160 = vmatprep.subr.mxu0 0.0
        %1161 = vmatpush1.msra.mxu0 0.0
        %1162 = vmatprep.subr.mxu0 0.0
        %1163 = vmatpush1.msra.mxu0 0.0
        %1164 = vmatprep.subr.mxu0 0.0
        %1165 = vmatpush1.msra.mxu0 0.0
        %1166 = vmatprep.subr.mxu0 0.0
        %1167 = vmatpush1.msra.mxu0 0.0
        %1168 = vmatprep.subr.mxu0 0.0
        %1169 = vmatpush1.msra.mxu0 0.0
        %1170 = vmatprep.subr.mxu0 0.0
        %1171 = vmatpush1.msra.mxu0 0.0
        %1172 = vmatprep.subr.mxu0 0.0
        %1173 = vmatpush1.msra.mxu0 0.0
        %1174 = vmatprep.subr.mxu0 0.0
        %1175 = vmatpush1.msra.mxu0 0.0
        %1176 = vmatprep.subr.mxu0 0.0
        %1177 = vmatpush1.msra.mxu0 0.0
        %1178 = vmatprep.subr.mxu0 0.0
        %1179 = vmatpush1.msra.mxu0 0.0
        %1180 = vmatprep.subr.mxu0 0.0
        %1181 = vmatpush1.msra.mxu0 0.0
        %1182 = vmatprep.subr.mxu0 0.0
        %1183 = vmatpush1.msra.mxu0 0.0
        %1184 = vmatprep.subr.mxu0 0.0
        %1185 = vmatpush1.msra.mxu0 0.0
        %1186 = vmatprep.subr.mxu0 0.0
        %1187 = vmatpush1.msra.mxu0 0.0
        %1188 = vmatprep.subr.mxu0 0.0
        %1189 = vmatpush1.msra.mxu0 0.0
        %1190 = vmatprep.subr.mxu0 0.0
        %1191 = vmatpush1.msra.mxu0 0.0
        %1192 = vmatprep.subr.mxu0 0.0
        %1193 = vmatpush1.msra.mxu0 0.0
        %1194 = vmatprep.mubr.f32.mxu0 0.0
        %1195 = vmatmul.mubr.f32.gmra.mrb[0].mxu0 %v1048
        %v1196 = vpop.f32.mrb[0].mxu0
        %v1197 = vadd.f32 %v1039, %v1196
        %v1198 = vpop.f32.mrb[0].mxu0
        %v1199 = vadd.f32 %v1039, %v1198
        %1200 = vmatprep.mubr.f32.mxu0 0.0
        %1201 = vmatmul.mubr.f32.gmra.mrb[0].mxu0 %v1051
        %v1202 = vpop.f32.mrb[0].mxu0
        %v1203 = vadd.f32 %v1044, %v1202
        %v1204 = vpop.f32.mrb[0].mxu0
        %v1205 = vadd.f32 %v1044, %v1204
        %1206 = vdwg.mxu0
        %1207 = vmatprep.subr.mxu0 %v1021
        %1208 = vmatpush1.msra.mxu0 %v1020
        %1209 = vmatprep.subr.mxu0 %v1029
        %1210 = vmatpush1.msra.mxu0 %v1028
        %1211 = vmatprep.subr.mxu0 0.0
        %1212 = vmatpush1.msra.mxu0 0.0
        %1213 = vmatprep.subr.mxu0 0.0
        %1214 = vmatpush1.msra.mxu0 0.0
        %1215 = vmatprep.subr.mxu0 0.0
        %1216 = vmatpush1.msra.mxu0 0.0
        %1217 = vmatprep.subr.mxu0 0.0
        %1218 = vmatpush1.msra.mxu0 0.0
        %1219 = vmatprep.subr.mxu0 0.0
        %1220 = vmatpush1.msra.mxu0 0.0
        %1221 = vmatprep.subr.mxu0 0.0
        %1222 = vmatpush1.msra.mxu0 0.0
        %1223 = vmatprep.subr.mxu0 0.0
        %1224 = vmatpush1.msra.mxu0 0.0
        %1225 = vmatprep.subr.mxu0 0.0
        %1226 = vmatpush1.msra.mxu0 0.0
        %1227 = vmatprep.subr.mxu0 0.0
        %1228 = vmatpush1.msra.mxu0 0.0
        %1229 = vmatprep.subr.mxu0 0.0
        %1230 = vmatpush1.msra.mxu0 0.0
        %1231 = vmatprep.subr.mxu0 0.0
        %1232 = vmatpush1.msra.mxu0 0.0
        %1233 = vmatprep.subr.mxu0 0.0
        %1234 = vmatpush1.msra.mxu0 0.0
        %1235 = vmatprep.subr.mxu0 0.0
        %1236 = vmatpush1.msra.mxu0 0.0
        %1237 = vmatprep.subr.mxu0 0.0
        %1238 = vmatpush1.msra.mxu0 0.0
        %1239 = vmatprep.subr.mxu0 0.0
        %1240 = vmatpush1.msra.mxu0 0.0
        %1241 = vmatprep.subr.mxu0 0.0
        %1242 = vmatpush1.msra.mxu0 0.0
        %1243 = vmatprep.subr.mxu0 0.0
        %1244 = vmatpush1.msra.mxu0 0.0
        %1245 = vmatprep.subr.mxu0 0.0
        %1246 = vmatpush1.msra.mxu0 0.0
        %1247 = vmatprep.subr.mxu0 0.0
        %1248 = vmatpush1.msra.mxu0 0.0
        %1249 = vmatprep.subr.mxu0 0.0
        %1250 = vmatpush1.msra.mxu0 0.0
        %1251 = vmatprep.subr.mxu0 0.0
        %1252 = vmatpush1.msra.mxu0 0.0
        %1253 = vmatprep.subr.mxu0 0.0
        %1254 = vmatpush1.msra.mxu0 0.0
        %1255 = vmatprep.subr.mxu0 0.0
        %1256 = vmatpush1.msra.mxu0 0.0
        %1257 = vmatprep.subr.mxu0 0.0
        %1258 = vmatpush1.msra.mxu0 0.0
        %1259 = vmatprep.subr.mxu0 0.0
        %1260 = vmatpush1.msra.mxu0 0.0
        %1261 = vmatprep.subr.mxu0 0.0
        %1262 = vmatpush1.msra.mxu0 0.0
        %1263 = vmatprep.subr.mxu0 0.0
        %1264 = vmatpush1.msra.mxu0 0.0
        %1265 = vmatprep.subr.mxu0 0.0
        %1266 = vmatpush1.msra.mxu0 0.0
        %1267 = vmatprep.subr.mxu0 0.0
        %1268 = vmatpush1.msra.mxu0 0.0
        %1269 = vmatprep.subr.mxu0 0.0
        %1270 = vmatpush1.msra.mxu0 0.0
        %1271 = vmatprep.mubr.f32.mxu0 0.0
        %1272 = vmatmul.mubr.f32.gmra.mrb[0].mxu0 %v1048
        %v1273 = vpop.f32.mrb[0].mxu0
        %v1274 = vadd.f32 %v1039, %v1273
        %v1275 = vpop.f32.mrb[0].mxu0
        %v1276 = vadd.f32 %v1039, %v1275
        %1277 = vmatprep.mubr.f32.mxu0 0.0
        %1278 = vmatmul.mubr.f32.gmra.mrb[0].mxu0 %v1051
        %v1279 = vpop.f32.mrb[0].mxu0
        %v1280 = vadd.f32 %v1044, %v1279
        %v1281 = vpop.f32.mrb[0].mxu0
        %v1282 = vadd.f32 %v1044, %v1281
        %1283 = vdwg.mxu0
        %1284 = vmatprep.subr.mxu0 %v1023
        %1285 = vmatpush1.msra.mxu0 %v1022
        %1286 = vmatprep.subr.mxu0 %v1031
        %1287 = vmatpush1.msra.mxu0 %v1030
        %1288 = vmatprep.subr.mxu0 0.0
        %1289 = vmatpush1.msra.mxu0 0.0
        %1290 = vmatprep.subr.mxu0 0.0
        %1291 = vmatpush1.msra.mxu0 0.0
        %1292 = vmatprep.subr.mxu0 0.0
        %1293 = vmatpush1.msra.mxu0 0.0
        %1294 = vmatprep.subr.mxu0 0.0
        %1295 = vmatpush1.msra.mxu0 0.0
        %1296 = vmatprep.subr.mxu0 0.0
        %1297 = vmatpush1.msra.mxu0 0.0
        %1298 = vmatprep.subr.mxu0 0.0
        %1299 = vmatpush1.msra.mxu0 0.0
        %1300 = vmatprep.subr.mxu0 0.0
        %1301 = vmatpush1.msra.mxu0 0.0
        %1302 = vmatprep.subr.mxu0 0.0
        %1303 = vmatpush1.msra.mxu0 0.0
        %1304 = vmatprep.subr.mxu0 0.0
        %1305 = vmatpush1.msra.mxu0 0.0
        %1306 = vmatprep.subr.mxu0 0.0
        %1307 = vmatpush1.msra.mxu0 0.0
        %1308 = vmatprep.subr.mxu0 0.0
        %1309 = vmatpush1.msra.mxu0 0.0
        %1310 = vmatprep.subr.mxu0 0.0
        %1311 = vmatpush1.msra.mxu0 0.0
        %1312 = vmatprep.subr.mxu0 0.0
        %1313 = vmatpush1.msra.mxu0 0.0
        %1314 = vmatprep.subr.mxu0 0.0
        %1315 = vmatpush1.msra.mxu0 0.0
        %1316 = vmatprep.subr.mxu0 0.0
        %1317 = vmatpush1.msra.mxu0 0.0
        %1318 = vmatprep.subr.mxu0 0.0
        %1319 = vmatpush1.msra.mxu0 0.0
        %1320 = vmatprep.subr.mxu0 0.0
        %1321 = vmatpush1.msra.mxu0 0.0
        %1322 = vmatprep.subr.mxu0 0.0
        %1323 = vmatpush1.msra.mxu0 0.0
        %1324 = vmatprep.subr.mxu0 0.0
        %1325 = vmatpush1.msra.mxu0 0.0
        %1326 = vmatprep.subr.mxu0 0.0
        %1327 = vmatpush1.msra.mxu0 0.0
        %1328 = vmatprep.subr.mxu0 0.0
        %1329 = vmatpush1.msra.mxu0 0.0
        %1330 = vmatprep.subr.mxu0 0.0
        %1331 = vmatpush1.msra.mxu0 0.0
        %1332 = vmatprep.subr.mxu0 0.0
        %1333 = vmatpush1.msra.mxu0 0.0
        %1334 = vmatprep.subr.mxu0 0.0
        %1335 = vmatpush1.msra.mxu0 0.0
        %1336 = vmatprep.subr.mxu0 0.0
        %1337 = vmatpush1.msra.mxu0 0.0
        %1338 = vmatprep.subr.mxu0 0.0
        %1339 = vmatpush1.msra.mxu0 0.0
        %1340 = vmatprep.subr.mxu0 0.0
        %1341 = vmatpush1.msra.mxu0 0.0
        %1342 = vmatprep.subr.mxu0 0.0
        %1343 = vmatpush1.msra.mxu0 0.0
        %1344 = vmatprep.subr.mxu0 0.0
        %1345 = vmatpush1.msra.mxu0 0.0
        %1346 = vmatprep.subr.mxu0 0.0
        %1347 = vmatpush1.msra.mxu0 0.0
        %1348 = vmatprep.mubr.f32.mxu0 0.0
        %1349 = vmatmul.mubr.f32.gmra.mrb[0].mxu0 %v1048
        %v1350 = vpop.f32.mrb[0].mxu0
        %v1351 = vadd.f32 %v1039, %v1350
        %v1352 = vpop.f32.mrb[0].mxu0
        %v1353 = vadd.f32 %v1039, %v1352
        %1354 = vmatprep.mubr.f32.mxu0 0.0
        %1355 = vmatmul.mubr.f32.gmra.mrb[0].mxu0 %v1051
        %v1356 = vpop.f32.mrb[0].mxu0
        %v1357 = vadd.f32 %v1044, %v1356
        %v1358 = vpop.f32.mrb[0].mxu0
        %v1359 = vadd.f32 %v1044, %v1358
        %1360 = vdwg.mxu0
        %v1361 = vmax.f32 %v1120, 0.0
        %v1362 = vmax.f32 %v1122, 0.0
        %v1363 = vmax.f32 %v1197, 0.0
        %v1364 = vmax.f32 %v1199, 0.0
        %v1365 = vmax.f32 %v1274, 0.0
        %v1366 = vmax.f32 %v1276, 0.0
        %v1367 = vmax.f32 %v1351, 0.0
        %v1368 = vmax.f32 %v1353, 0.0
        %v1369 = vmax.f32 %v1126, 0.0
        %v1370 = vmax.f32 %v1128, 0.0
        %v1371 = vmax.f32 %v1203, 0.0
        %v1372 = vmax.f32 %v1205, 0.0
        %v1373 = vmax.f32 %v1280, 0.0
        %v1374 = vmax.f32 %v1282, 0.0
        %v1375 = vmax.f32 %v1357, 0.0
        %v1376 = vmax.f32 %v1359, 0.0
        %v1377 = vmax.f32 %v1361, %v1362
        %v1378 = vmax.f32 %v1369, %v1370
        %v1379 = vmax.f32 %v1377, %v1363
        %v1380 = vmax.f32 %v1378, %v1371
        %v1381 = vmax.f32 %v1379, %v1364
        %v1382 = vmax.f32 %v1380, %v1372
        %v1383 = vmax.f32 %v1381, %v1365
        %v1384 = vmax.f32 %v1382, %v1373
        %v1385 = vmax.f32 %v1383, %v1366
        %v1386 = vmax.f32 %v1384, %v1374
        %v1387 = vmax.f32 %v1385, %v1367
        %v1388 = vmax.f32 %v1386, %v1375
        %v1389 = vmax.f32 %v1387, %v1368
        %v1390 = vmax.f32 %v1388, %v1376
        %1391 = vst [vmem:[%s358] sm:$0xff] %v1389
        %1392 = vst [vmem:[%s358 + $0x8] sm:$0xff] %v1390
        %s1393 = sand.u32 %s203, 1
        %s1394 = scalar_lea.sflag [#allocation4], %s1393
        %s1395 = sand.u32 %s203, 1
        %s1396 = smul.addr %s1395, 16
        %s1397 = scalar_lea.vmem [#allocation5], %s1396
        // Predicated region
        $region49: #{tpu_custom_call.1} parent=43 // pred_check
          %p1398 = pneg %p213
        $region50: #{tpu_custom_call.1} parent=43 // pred_check_branch
          %1400 = sbr.rel (%p1398) target = $region52
        $region51: #{tpu_custom_call.1} parent=43 // pred_region
          %s1402 = ssub.s32 256, 256
          %1403 = vsyncadd %s1394, %s1402
          %s1404 = smul.addr %s27, 2
          %s1405 = sadd.s32 %s28, %s1404
          %s1406 = smul.addr %s1405, 128
          %s1407 = scalar_lea.hbm %s6, %s1406
          %s1408 = sshll.u32 %s1397, 4
          %s1409 = int_to_ptr.vmem [resolvable:$true] %s1408
          %1414 = dma.vmem_to_hbm [thread:$0]  %s1409, 256, %s1407, %s1394, 128, 128, 8
        $region52: #{tpu_custom_call.1} parent=43 // pred_fallthru
          _
      $region44: #{tpu_custom_call.1} parent=5 // pred_fallthru
        _
      %p1415 = scmp.le.s32.totalorder 2, %s18
      // Predicated region
      $region53: #{tpu_custom_call.1} parent=5 // pred_check
        %p1416 = pneg %p1415
      $region54: #{tpu_custom_call.1} parent=5 // pred_check_branch
        %1418 = sbr.rel (%p1416) target = $region56
      $region55: #{tpu_custom_call.1} parent=5 // pred_region
        %s1419 = ssub.s32 %s18, 2
        // Predicated region
        $region57: #{tpu_custom_call.1} parent=55 // pred_check
          %p1420 = pneg %p219
        $region58: #{tpu_custom_call.1} parent=55 // pred_check_branch
          %1422 = sbr.rel (%p1420) target = $region60
        $region59: #{tpu_custom_call.1} parent=55 // pred_region
          %s1423 = sand.u32 %s204, 1
          %s1424 = scalar_lea.sflag [#allocation4], %s1423
          %s1425 = sand.u32 %s204, 1
          %s1426 = smul.addr %s1425, 16
          %s1427 = scalar_lea.vmem [#allocation5], %s1426
          %1428 = dma.done %s1424, 256
        $region60: #{tpu_custom_call.1} parent=55 // pred_fallthru
          _
      $region56: #{tpu_custom_call.1} parent=5 // pred_fallthru
        _
    $region6: #{tpu_custom_call.1} parent=1 // loop_footer
      %s22 = sadd.s32 1, %s18
    $region7: #{tpu_custom_call.1} parent=1 // loop_footer_branch
      %17 = sbr.rel target = $region3
    $region8: #{tpu_custom_call.1} parent=1 // loop_exit
      _
    %1429 = vsyncpa [#allocation3], 1
    %s1430 = scalar_lea.sflag [#allocation3], 1
    %1431 = vsyncpa %s1430, 1
    %1432 = vsyncpa [#allocation4], 1
    %s1433 = scalar_lea.sflag [#allocation4], 1
    %1434 = vsyncpa %s1433, 1

</llo_original>
